<compile_context>
chip_gen: v7x
topology: tpu7x:2x2x1
jax: 0.10.0
libtpu: 0.0.40
codegen_flags: <defaults>
</compile_context>

<pallas_src>
import functools

import jax
import jax.numpy as jnp
from jax.experimental import pallas as pl
from jax.experimental.pallas import tpu as pltpu

HID = 768  # hidden width of the MLP


def _mlp_kernel(x_ref, w1_ref, b1_ref, w2_ref, b2_ref, w3_ref, b3_ref, o_ref):
    """Fused 3-layer MLP: (x@W1+b1)->GELU->(@W2+b2)->GELU->(.w3 row-reduce +b3)."""
    # bf16 operands into the MXU, f32 accumulation.  If x already arrives in
    # bf16 (recommended producer contract) this astype is a no-op.
    x = x_ref[...].astype(jnp.bfloat16)

    h = jnp.dot(x, w1_ref[...], preferred_element_type=jnp.float32) + b1_ref[...]
    h = jax.nn.gelu(h, approximate=True)          # tanh GELU -> EUP slot
    # Dropout(0.1): identity at inference time.

    h = jnp.dot(h.astype(jnp.bfloat16), w2_ref[...],
                preferred_element_type=jnp.float32) + b2_ref[...]
    h = jax.nn.gelu(h, approximate=True)
    # Dropout(0.1): identity at inference time.

    # Layer 3 (N=1): VPU multiply + lane reduction instead of an MXU matmul.
    o = jnp.sum(h * w3_ref[...], axis=-1, keepdims=True) + b3_ref[...]  # (tb, 1)
    o_ref[...] = o.astype(o_ref.dtype)


def _device_config():
    """Generation-aware (block_b, vmem_limit, megacore) defaults."""
    try:
        kind = jax.devices()[0].device_kind.lower()
    except Exception:  # pragma: no cover - no devices visible
        kind = ""
    if ("v5e" in kind) or ("v5 lite" in kind) or ("v5lite" in kind):
        # v5e: compute-bound at tb=512; explicit 32 MiB since scoped default is 16.
        return dict(block_b=512, vmem_limit_bytes=32 * 1024 * 1024, two_tc=False)
    if "v7" in kind:
        # v7x: only 64 MiB physical VMEM/TC -> conservative scoped budget; 2 TCs
        # -> keep >=2 grid steps when the batch allows so "parallel" can shard.
        return dict(block_b=1024, vmem_limit_bytes=48 * 1024 * 1024, two_tc=True)
    # v6e (and other large-VMEM chips): big tile, generous budget, single TC.
    return dict(block_b=1024, vmem_limit_bytes=64 * 1024 * 1024, two_tc=False)


def _choose_batch_tile(B: int, block_b: int, keep_two_steps: bool) -> int:
    """Batch tile: multiple of 8, <= block_b; on 2-TC chips keep >= 2 grid steps
    when the batch allows (so dimension_semantics=('parallel',) can shard)."""
    B8 = max(8, -(-B // 8) * 8)          # batch rounded up to a sublane multiple
    tb = min(block_b, B8)
    if keep_two_steps and B8 >= 16:
        half = -(-(B8 // 2) // 8) * 8    # ceil(B8/2) rounded up to multiple of 8
        tb = min(tb, half)
    return max(8, (tb // 8) * 8)


@functools.partial(jax.jit, static_argnames=("tb", "vmem_limit_bytes"))
def _regressor_forward_impl(x, params, *, tb, vmem_limit_bytes):
    w1, b1, w2, b2, w3, b3 = params
    B, E = x.shape

    # MXU-native bf16 weights (no-op if already bf16); biases and the layer-3
    # row stay f32 since they act on the f32 accumulator.
    w1 = w1.astype(jnp.bfloat16)
    w2 = w2.astype(jnp.bfloat16)
    b1 = b1.astype(jnp.float32).reshape(1, HID)
    b2 = b2.astype(jnp.float32).reshape(1, HID)
    w3 = w3.astype(jnp.float32).reshape(1, HID)
    b3 = b3.astype(jnp.float32).reshape(1, 1)

    Bp = -(-B // tb) * tb
    if Bp != B:
        x = jnp.pad(x, ((0, Bp - B), (0, 0)))

    # Untiled VMEM operands: DMA'd once per launch, single-buffered (no wasted
    # double-buffer for constant-index blocks).
    vmem_resident = pl.BlockSpec(memory_space=pltpu.MemorySpace.VMEM)

    out = pl.pallas_call(
        _mlp_kernel,
        out_shape=jax.ShapeDtypeStruct((Bp, 1), jnp.float32),
        grid_spec=pltpu.PrefetchScalarGridSpec(
            num_scalar_prefetch=0,
            grid=(Bp // tb,),
            in_specs=[
                # x tile: the only HBM stream that scales with B (bf16 preferred).
                pl.BlockSpec((tb, E), lambda i: (i, 0)),
                vmem_resident,   # W1 (bf16)
                vmem_resident,   # b1
                vmem_resident,   # W2 (bf16)
                vmem_resident,   # b2
                vmem_resident,   # w3 as a [1,768] row (no [768,1] lane padding)
                vmem_resident,   # b3
            ],
            out_specs=pl.BlockSpec((tb, 1), lambda i: (i, 0)),
        ),
        compiler_params=pltpu.CompilerParams(
            dimension_semantics=("parallel",),   # batch axis -> 2-TC shard on v7x
            vmem_limit_bytes=vmem_limit_bytes,   # generation-aware scoped budget
        ),
    )(x, w1, b1, w2, b2, w3, b3)

    return out[:B, 0]  # squeeze(1)


def regressor_forward(x, params, *, block_b=None, vmem_limit_bytes=None):
    """x: [B, emb_dim] (bf16 preferred, f32 accepted) -> [B] f32 == mlp(x).squeeze(1).

    Producer contract: pass x in bf16 to halve the per-row HBM stream; the
    kernel casts internally if x arrives in f32.
    """
    cfg = _device_config()
    if block_b is None:
        block_b = cfg["block_b"]
    if vmem_limit_bytes is None:
        vmem_limit_bytes = cfg["vmem_limit_bytes"]
    tb = _choose_batch_tile(int(x.shape[0]), int(block_b), cfg["two_tc"])
    return _regressor_forward_impl(x, params, tb=tb,
                                   vmem_limit_bytes=int(vmem_limit_bytes))


def init_params(key, emb_dim):
    """Deterministic init mimicking nn.Linear default U(-1/sqrt(fan_in), +)."""
    ks = jax.random.split(key, 6)

    def linear(kw, kb, fan_in, fan_out):
        bound = 1.0 / (fan_in ** 0.5)
        w = jax.random.uniform(kw, (fan_in, fan_out), jnp.float32, -bound, bound)
        b = jax.random.uniform(kb, (1, fan_out), jnp.float32, -bound, bound)
        return w, b

    w1, b1 = linear(ks[0], ks[1], emb_dim, HID)
    w2, b2 = linear(ks[2], ks[3], HID, HID)
    w3, b3 = linear(ks[4], ks[5], HID, 1)
    # Store MXU weights in bf16; keep layer-3 weight as an f32 [1, HID] row.
    return (w1.astype(jnp.bfloat16), b1,
            w2.astype(jnp.bfloat16), b2,
            w3.reshape(1, HID), b3.reshape(1, 1))


def _reference_forward(x, params):
    """Exact f32 / erf-GELU reference (PyTorch eval-mode semantics)."""
    w1, b1, w2, b2, w3, b3 = params
    w1 = w1.astype(jnp.float32)
    w2 = w2.astype(jnp.float32)
    h = jax.nn.gelu(x @ w1 + b1, approximate=False)
    h = jax.nn.gelu(h @ w2 + b2, approximate=False)
    return jnp.sum(h * w3, axis=-1) + b3[0, 0]


if __name__ == "__main__":
    key = jax.random.PRNGKey(0)
    k_x, k_p = jax.random.split(key)

    emb_dim = 32
    params = init_params(k_p, emb_dim)

    # Case 1: f32 x fallback path, single-tile grid, device-tuned defaults.
    x1 = jax.random.normal(jax.random.fold_in(k_x, 0), (8, emb_dim), jnp.float32)
    out1 = jax.block_until_ready(regressor_forward(x1, params))
    ref1 = _reference_forward(x1, params)
    assert out1.shape == (8,), out1.shape
    assert jnp.allclose(out1, ref1, atol=2e-2, rtol=2e-2), (out1, ref1)

    # Case 2: bf16 x (recommended producer contract); block_b=16 forces a
    # multi-tile grid with batch padding regardless of the chip generation.
    x2_f32 = jax.random.normal(jax.random.fold_in(k_x, 1), (24, emb_dim), jnp.float32)
    x2 = x2_f32.astype(jnp.bfloat16)
    out2 = jax.block_until_ready(regressor_forward(x2, params, block_b=16))
    ref2 = _reference_forward(x2.astype(jnp.float32), params)
    assert out2.shape == (24,), out2.shape
    # bf16 MXU operands + tanh GELU vs f32/erf reference: small numeric drift.
    assert jnp.allclose(out2, ref2, atol=2e-2, rtol=2e-2), (out2, ref2)

    print("KERNEL_OK")
</pallas_src>

<mosaic_0001>
module attributes {stable_mosaic.version = 11 : i64} {
  func.func @_mlp_kernel(%arg0: i32, %arg1: memref<8x32xf32, #tpu.memory_space<vmem>>, %arg2: memref<32x768xbf16, #tpu.memory_space<vmem>>, %arg3: memref<1x768xf32, #tpu.memory_space<vmem>>, %arg4: memref<768x768xbf16, #tpu.memory_space<vmem>>, %arg5: memref<1x768xf32, #tpu.memory_space<vmem>>, %arg6: memref<1x768xf32, #tpu.memory_space<vmem>>, %arg7: memref<1x1xf32, #tpu.memory_space<vmem>>, %arg8: memref<8x1xf32, #tpu.memory_space<vmem>>) attributes {dimension_semantics = [#tpu.dimension_semantics<parallel>], iteration_bounds = array<i64: 1>, scalar_prefetch = 0 : i64, scratch_operands = 0 : i64, tpu.core_type = #tpu.core_type<tc>, window_params = [{transform_indices = @transform_0, window_bounds = array<i64: 8, 32>}, {pipeline_mode = #tpu.pipeline_mode<synchronous>, transform_indices = @transform_1, window_bounds = array<i64: 32, 768>}, {pipeline_mode = #tpu.pipeline_mode<synchronous>, transform_indices = @transform_2, window_bounds = array<i64: 1, 768>}, {pipeline_mode = #tpu.pipeline_mode<synchronous>, transform_indices = @transform_3, window_bounds = array<i64: 768, 768>}, {pipeline_mode = #tpu.pipeline_mode<synchronous>, transform_indices = @transform_4, window_bounds = array<i64: 1, 768>}, {pipeline_mode = #tpu.pipeline_mode<synchronous>, transform_indices = @transform_5, window_bounds = array<i64: 1, 768>}, {pipeline_mode = #tpu.pipeline_mode<synchronous>, transform_indices = @transform_6, window_bounds = array<i64: 1, 1>}, {transform_indices = @transform_7, window_bounds = array<i64: 8, 1>}]} {
    %c0 = arith.constant 0 : index
    %c0_0 = arith.constant 0 : index
    %0 = vector.load %arg1[%c0, %c0_0] : memref<8x32xf32, #tpu.memory_space<vmem>>, vector<8x32xf32>
    %1 = arith.truncf %0 : vector<8x32xf32> to vector<8x32xbf16>
    %c0_1 = arith.constant 0 : index
    %c0_2 = arith.constant 0 : index
    %2 = vector.load %arg2[%c0_1, %c0_2] : memref<32x768xbf16, #tpu.memory_space<vmem>>, vector<32x768xbf16>
    %cst = arith.constant dense<0.000000e+00> : vector<8x768xf32>
    %3 = tpu.matmul %1, %2, %cst {dimension_numbers = #tpu.dot_dimension_numbers<[1], [0], [0], [1], [0, 0, 1, 1], [], []>} : vector<8x32xbf16>, vector<32x768xbf16>, vector<8x768xf32> -> vector<8x768xf32>
    %c0_3 = arith.constant 0 : index
    %c0_4 = arith.constant 0 : index
    %4 = vector.load %arg3[%c0_3, %c0_4] : memref<1x768xf32, #tpu.memory_space<vmem>>, vector<1x768xf32>
    %5 = vector.broadcast %4 : vector<1x768xf32> to vector<8x768xf32>
    %6 = arith.addf %3, %5 : vector<8x768xf32>
    %7 = arith.mulf %6, %6 : vector<8x768xf32>
    %8 = arith.mulf %6, %7 : vector<8x768xf32>
    %cst_5 = arith.constant 4.471500e-02 : f32
    %9 = vector.broadcast %cst_5 : f32 to vector<8x768xf32>
    %10 = arith.mulf %9, %8 : vector<8x768xf32>
    %11 = arith.addf %6, %10 : vector<8x768xf32>
    %cst_6 = arith.constant 0.797884583 : f32
    %12 = vector.broadcast %cst_6 : f32 to vector<8x768xf32>
    %13 = arith.mulf %12, %11 : vector<8x768xf32>
    %14 = math.tanh %13 : vector<8x768xf32>
    %cst_7 = arith.constant 1.000000e+00 : f32
    %15 = vector.broadcast %cst_7 : f32 to vector<8x768xf32>
    %16 = arith.addf %15, %14 : vector<8x768xf32>
    %cst_8 = arith.constant 5.000000e-01 : f32
    %17 = vector.broadcast %cst_8 : f32 to vector<8x768xf32>
    %18 = arith.mulf %17, %16 : vector<8x768xf32>
    %19 = arith.mulf %6, %18 : vector<8x768xf32>
    %20 = arith.truncf %19 : vector<8x768xf32> to vector<8x768xbf16>
    %c0_9 = arith.constant 0 : index
    %c0_10 = arith.constant 0 : index
    %21 = vector.load %arg4[%c0_9, %c0_10] : memref<768x768xbf16, #tpu.memory_space<vmem>>, vector<768x768xbf16>
    %cst_11 = arith.constant dense<0.000000e+00> : vector<8x768xf32>
    %22 = tpu.matmul %20, %21, %cst_11 {dimension_numbers = #tpu.dot_dimension_numbers<[1], [0], [0], [1], [0, 0, 1, 1], [], []>} : vector<8x768xbf16>, vector<768x768xbf16>, vector<8x768xf32> -> vector<8x768xf32>
    %c0_12 = arith.constant 0 : index
    %c0_13 = arith.constant 0 : index
    %23 = vector.load %arg5[%c0_12, %c0_13] : memref<1x768xf32, #tpu.memory_space<vmem>>, vector<1x768xf32>
    %24 = vector.broadcast %23 : vector<1x768xf32> to vector<8x768xf32>
    %25 = arith.addf %22, %24 : vector<8x768xf32>
    %26 = arith.mulf %25, %25 : vector<8x768xf32>
    %27 = arith.mulf %25, %26 : vector<8x768xf32>
    %cst_14 = arith.constant 4.471500e-02 : f32
    %28 = vector.broadcast %cst_14 : f32 to vector<8x768xf32>
    %29 = arith.mulf %28, %27 : vector<8x768xf32>
    %30 = arith.addf %25, %29 : vector<8x768xf32>
    %cst_15 = arith.constant 0.797884583 : f32
    %31 = vector.broadcast %cst_15 : f32 to vector<8x768xf32>
    %32 = arith.mulf %31, %30 : vector<8x768xf32>
    %33 = math.tanh %32 : vector<8x768xf32>
    %cst_16 = arith.constant 1.000000e+00 : f32
    %34 = vector.broadcast %cst_16 : f32 to vector<8x768xf32>
    %35 = arith.addf %34, %33 : vector<8x768xf32>
    %cst_17 = arith.constant 5.000000e-01 : f32
    %36 = vector.broadcast %cst_17 : f32 to vector<8x768xf32>
    %37 = arith.mulf %36, %35 : vector<8x768xf32>
    %38 = arith.mulf %25, %37 : vector<8x768xf32>
    %c0_18 = arith.constant 0 : index
    %c0_19 = arith.constant 0 : index
    %39 = vector.load %arg6[%c0_18, %c0_19] : memref<1x768xf32, #tpu.memory_space<vmem>>, vector<1x768xf32>
    %40 = vector.broadcast %39 : vector<1x768xf32> to vector<8x768xf32>
    %41 = arith.mulf %38, %40 : vector<8x768xf32>
    %cst_20 = arith.constant dense<0.000000e+00> : vector<8xf32>
    %42 = vector.multi_reduction <add>, %41, %cst_20 [1] : vector<8x768xf32> to vector<8xf32>
    %43 = vector.shape_cast %42 : vector<8xf32> to vector<8x1xf32>
    %c0_21 = arith.constant 0 : index
    %c0_22 = arith.constant 0 : index
    %44 = vector.load %arg7[%c0_21, %c0_22] : memref<1x1xf32, #tpu.memory_space<vmem>>, vector<1x1xf32>
    %45 = vector.broadcast %44 : vector<1x1xf32> to vector<8x1xf32>
    %46 = arith.addf %43, %45 : vector<8x1xf32>
    %c0_23 = arith.constant 0 : index
    %c0_24 = arith.constant 0 : index
    %47 = vector.load %arg8[%c0_23, %c0_24] : memref<8x1xf32, #tpu.memory_space<vmem>>, vector<8x1xf32>
    tpu.vector_store %arg8[%c0_23, %c0_24], %46 {strides = array<i32>} : memref<8x1xf32, #tpu.memory_space<vmem>>, vector<8x1xf32>,
    return
  }
  func.func @transform_0(%arg0: i32) -> (i32, i32) {
    %c0_i32 = arith.constant 0 : i32
    %c0_i32_0 = arith.constant 0 : i32
    return %arg0, %c0_i32 : i32, i32
  }
  func.func @transform_1(%arg0: i32) -> (i32, i32) {
    %c0_i32 = arith.constant 0 : i32
    %c0_i32_0 = arith.constant 0 : i32
    %c0_i32_1 = arith.constant 0 : i32
    return %c0_i32, %c0_i32_0 : i32, i32
  }
  func.func @transform_2(%arg0: i32) -> (i32, i32) {
    %c0_i32 = arith.constant 0 : i32
    %c0_i32_0 = arith.constant 0 : i32
    %c0_i32_1 = arith.constant 0 : i32
    return %c0_i32, %c0_i32_0 : i32, i32
  }
  func.func @transform_3(%arg0: i32) -> (i32, i32) {
    %c0_i32 = arith.constant 0 : i32
    %c0_i32_0 = arith.constant 0 : i32
    %c0_i32_1 = arith.constant 0 : i32
    return %c0_i32, %c0_i32_0 : i32, i32
  }
  func.func @transform_4(%arg0: i32) -> (i32, i32) {
    %c0_i32 = arith.constant 0 : i32
    %c0_i32_0 = arith.constant 0 : i32
    %c0_i32_1 = arith.constant 0 : i32
    return %c0_i32, %c0_i32_0 : i32, i32
  }
  func.func @transform_5(%arg0: i32) -> (i32, i32) {
    %c0_i32 = arith.constant 0 : i32
    %c0_i32_0 = arith.constant 0 : i32
    %c0_i32_1 = arith.constant 0 : i32
    return %c0_i32, %c0_i32_0 : i32, i32
  }
  func.func @transform_6(%arg0: i32) -> (i32, i32) {
    %c0_i32 = arith.constant 0 : i32
    %c0_i32_0 = arith.constant 0 : i32
    %c0_i32_1 = arith.constant 0 : i32
    return %c0_i32, %c0_i32_0 : i32, i32
  }
  func.func @transform_7(%arg0: i32) -> (i32, i32) {
    %c0_i32 = arith.constant 0 : i32
    %c0_i32_0 = arith.constant 0 : i32
    return %arg0, %c0_i32 : i32, i32
  }
}

</mosaic_0001>

<llo_original>
// kernel: _regressor_forward_impl.1
$region0: #{_regressor_forward_impl.1}
  #allocation0 [shape = 'u32[]', space=smem, size = 0x4, offset = 0x4, fixed_abs, tag = 'smem constant byte address 0x4 - core index']
  #allocation1 [shape = 'u32[144,128]{1,0:T(1,128)}', space=vmem, size = 0x12000, scoped, tag = 'internal scratch']
  #allocation2 [shape = 'f32[1,1]{1,0:T(1,128)S(1)}', space=vmem, size = 0x200, scoped, tag = 'scoped memory for _regressor_forward_impl.1']
  %s0 = inlined_call_operand.hbm [shape: f32[8,32], index: 0, kind: input, shape index: {}]
  %s1 = inlined_call_operand.hbm [shape: bf16[32,768], index: 1, kind: input, shape index: {}]
  %s2 = inlined_call_operand.hbm [shape: f32[1,768], index: 2, kind: input, shape index: {}]
  %s3 = inlined_call_operand.hbm [shape: bf16[768,768], index: 3, kind: input, shape index: {}]
  %s4 = inlined_call_operand.hbm [shape: f32[1,768], index: 4, kind: input, shape index: {}]
  %s5 = inlined_call_operand.hbm [shape: f32[1,768], index: 5, kind: input, shape index: {}]
  %s6 = inlined_call_operand.<no memory space> [shape: f32[1,1], index: 6, kind: input, shape index: {}]
  %s7 = inlined_call_operand.hbm [shape: f32[8,1], index: 7, kind: output, shape index: {}]
  %s8 = sld [smem:[#allocation0]]
  $region62: #{_regressor_forward_impl.1} parent=0
    _
  %s10 = ssub.s32 1, %s8
  %s11 = scalar_select 0, %s10, %s8
  %v12 = vstv %s6
  %13 = vst [vmem:[#allocation2] sm:$0x1] %v12
  $region1: #{_regressor_forward_impl.1} parent=0
    #allocation3 [shape = 'u8[4096]{0}', space=vmem, size = 0x1000, scoped, tag = 'input window, operand 0, single buffered']
    #allocation4 [shape = 's32[1]{0}', space=sflag, size = 0x4, scoped, tag = 'scoped memory for _regressor_forward_impl.1']
    #allocation5 [shape = 's32[1]{0}', space=sflag, size = 0x4, scoped, tag = 'scoped memory for _regressor_forward_impl.1']
    #allocation6 [shape = 'u8[49152]{0}', space=vmem, size = 0xc000, scoped, tag = 'input window, operand 1, single buffered']
    #allocation7 [shape = 's32[1]{0}', space=sflag, size = 0x4, scoped, tag = 'scoped memory for _regressor_forward_impl.1']
    #allocation8 [shape = 'u8[3072]{0}', space=vmem, size = 0xc00, scoped, tag = 'input window, operand 2, single buffered']
    #allocation9 [shape = 'u8[1179648]{0}', space=vmem, size = 0x120000, scoped, tag = 'input window, operand 3, single buffered']
    #allocation10 [shape = 's32[1]{0}', space=sflag, size = 0x4, scoped, tag = 'scoped memory for _regressor_forward_impl.1']
    #allocation11 [shape = 'u8[3072]{0}', space=vmem, size = 0xc00, scoped, tag = 'input window, operand 4, single buffered']
    #allocation12 [shape = 'u8[3072]{0}', space=vmem, size = 0xc00, scoped, tag = 'input window, operand 5, single buffered']
    #allocation13 [shape = 's32[1]{0}', space=sflag, size = 0x4, scoped, tag = 'scoped memory for _regressor_forward_impl.1']
    #allocation14 [shape = 'u8[4096]{0}', space=vmem, size = 0x1000, scoped, tag = 'output window, operand 0, single buffered']
    %14 = vsyncpa [#allocation4], 0
    %15 = vsyncpa [#allocation7], 0
    %16 = vsyncpa [#allocation10], 0
    %17 = vsyncpa [#allocation13], 0
    %18 = vsyncpa [#allocation5], 0
    // Predicated region
    $region2: #{_regressor_forward_impl.1} parent=1 // pred_check
      _
    $region3: #{_regressor_forward_impl.1} parent=1 // pred_check_branch
      %20 = sbr.rel (0) target = $region5
    $region4: #{_regressor_forward_impl.1} parent=1 // pred_region
      %s22 = ssub.s32 128, 128
      %23 = vsyncadd [#allocation4], %s22
      %s25 = sshll.u32 [#allocation3], 4
      %s26 = int_to_ptr.vmem [resolvable:$true] %s25
      %28 = dma.hbm_to_vmem [thread:$0]  %s0, 128, %s26, [#allocation4]
    $region5: #{_regressor_forward_impl.1} parent=1 // pred_fallthru
      _
    // Predicated region
    $region6: #{_regressor_forward_impl.1} parent=1 // pred_check
      _
    $region7: #{_regressor_forward_impl.1} parent=1 // pred_check_branch
      %30 = sbr.rel (0) target = $region9
    $region8: #{_regressor_forward_impl.1} parent=1 // pred_region
      %s32 = ssub.s32 1536, 1536
      %33 = vsyncadd [#allocation7], %s32
      %s34 = sshll.u32 [#allocation6], 4
      %s35 = int_to_ptr.vmem [resolvable:$true] %s34
      %40 = dma.hbm_to_vmem [thread:$0]  %s1, 1536, %s35, [#allocation7], 384, 384, 24
    $region9: #{_regressor_forward_impl.1} parent=1 // pred_fallthru
      _
    // Predicated region
    $region10: #{_regressor_forward_impl.1} parent=1 // pred_check
      _
    $region11: #{_regressor_forward_impl.1} parent=1 // pred_check_branch
      %42 = sbr.rel (0) target = $region13
    $region12: #{_regressor_forward_impl.1} parent=1 // pred_region
      %s44 = ssub.s32 96, 96
      %45 = vsyncadd [#allocation7], %s44
      %s47 = sshll.u32 [#allocation8], 4
      %s48 = int_to_ptr.vmem [resolvable:$true] %s47
      %50 = dma.hbm_to_vmem [thread:$0]  %s2, 96, %s48, [#allocation7]
    $region13: #{_regressor_forward_impl.1} parent=1 // pred_fallthru
      _
    // Predicated region
    $region14: #{_regressor_forward_impl.1} parent=1 // pred_check
      _
    $region15: #{_regressor_forward_impl.1} parent=1 // pred_check_branch
      %52 = sbr.rel (0) target = $region17
    $region16: #{_regressor_forward_impl.1} parent=1 // pred_region
      %s54 = ssub.s32 36864, 36864
      %55 = vsyncadd [#allocation10], %s54
      %s56 = sshll.u32 [#allocation9], 4
      %s57 = int_to_ptr.vmem [resolvable:$true] %s56
      %62 = dma.hbm_to_vmem [thread:$0]  %s3, 36864, %s57, [#allocation10], 384, 384, 24
    $region17: #{_regressor_forward_impl.1} parent=1 // pred_fallthru
      _
    // Predicated region
    $region18: #{_regressor_forward_impl.1} parent=1 // pred_check
      _
    $region19: #{_regressor_forward_impl.1} parent=1 // pred_check_branch
      %64 = sbr.rel (0) target = $region21
    $region20: #{_regressor_forward_impl.1} parent=1 // pred_region
      %s66 = ssub.s32 96, 96
      %67 = vsyncadd [#allocation10], %s66
      %s69 = sshll.u32 [#allocation11], 4
      %s70 = int_to_ptr.vmem [resolvable:$true] %s69
      %72 = dma.hbm_to_vmem [thread:$0]  %s4, 96, %s70, [#allocation10]
    $region21: #{_regressor_forward_impl.1} parent=1 // pred_fallthru
      _
    // Predicated region
    $region22: #{_regressor_forward_impl.1} parent=1 // pred_check
      _
    $region23: #{_regressor_forward_impl.1} parent=1 // pred_check_branch
      %74 = sbr.rel (0) target = $region25
    $region24: #{_regressor_forward_impl.1} parent=1 // pred_region
      %s76 = ssub.s32 96, 96
      %77 = vsyncadd [#allocation13], %s76
      %s79 = sshll.u32 [#allocation12], 4
      %s80 = int_to_ptr.vmem [resolvable:$true] %s79
      %82 = dma.hbm_to_vmem [thread:$0]  %s5, 96, %s80, [#allocation13]
    $region25: #{_regressor_forward_impl.1} parent=1 // pred_fallthru
      _
    // Predicated region
    $region26: #{_regressor_forward_impl.1} parent=1 // pred_check
      _
    $region27: #{_regressor_forward_impl.1} parent=1 // pred_check_branch
      %84 = sbr.rel (0) target = $region29
    $region28: #{_regressor_forward_impl.1} parent=1 // pred_region
      _
    $region29: #{_regressor_forward_impl.1} parent=1 // pred_fallthru
      _
    // Predicated region
    $region30: #{_regressor_forward_impl.1} parent=1 // pred_check
      _
    $region31: #{_regressor_forward_impl.1} parent=1 // pred_check_branch
      %86 = sbr.rel (0) target = $region33
    $region32: #{_regressor_forward_impl.1} parent=1 // pred_region
      %87 = dma.done [#allocation4], 128
    $region33: #{_regressor_forward_impl.1} parent=1 // pred_fallthru
      _
    // Predicated region
    $region34: #{_regressor_forward_impl.1} parent=1 // pred_check
      _
    $region35: #{_regressor_forward_impl.1} parent=1 // pred_check_branch
      %89 = sbr.rel (0) target = $region37
    $region36: #{_regressor_forward_impl.1} parent=1 // pred_region
      %90 = dma.done [#allocation7], 1536
    $region37: #{_regressor_forward_impl.1} parent=1 // pred_fallthru
      _
    // Predicated region
    $region38: #{_regressor_forward_impl.1} parent=1 // pred_check
      _
    $region39: #{_regressor_forward_impl.1} parent=1 // pred_check_branch
      %92 = sbr.rel (0) target = $region41
    $region40: #{_regressor_forward_impl.1} parent=1 // pred_region
      %93 = dma.done [#allocation7], 96
    $region41: #{_regressor_forward_impl.1} parent=1 // pred_fallthru
      _
    // Predicated region
    $region42: #{_regressor_forward_impl.1} parent=1 // pred_check
      _
    $region43: #{_regressor_forward_impl.1} parent=1 // pred_check_branch
      %95 = sbr.rel (0) target = $region45
    $region44: #{_regressor_forward_impl.1} parent=1 // pred_region
      %96 = dma.done [#allocation10], 36864
    $region45: #{_regressor_forward_impl.1} parent=1 // pred_fallthru
      _
    // Predicated region
    $region46: #{_regressor_forward_impl.1} parent=1 // pred_check
      _
    $region47: #{_regressor_forward_impl.1} parent=1 // pred_check_branch
      %98 = sbr.rel (0) target = $region49
    $region48: #{_regressor_forward_impl.1} parent=1 // pred_region
      %99 = dma.done [#allocation10], 96
    $region49: #{_regressor_forward_impl.1} parent=1 // pred_fallthru
      _
    // Predicated region
    $region50: #{_regressor_forward_impl.1} parent=1 // pred_check
      _
    $region51: #{_regressor_forward_impl.1} parent=1 // pred_check_branch
      %101 = sbr.rel (0) target = $region53
    $region52: #{_regressor_forward_impl.1} parent=1 // pred_region
      %102 = dma.done [#allocation13], 96
    $region53: #{_regressor_forward_impl.1} parent=1 // pred_fallthru
      _
    %v104 = vld [vmem:[#allocation3] sm:$0xff]
    %v105 = vpack.c.bf16 %v104, %v104
    %v106 = vld [vmem:[#allocation6] sm:$0xff]
    %v107 = vld [vmem:[#allocation6 + $0x8] sm:$0xff]
    %v108 = vld [vmem:[#allocation6 + $0x10] sm:$0xff]
    %v109 = vld [vmem:[#allocation6 + $0x18] sm:$0xff]
    %v110 = vld [vmem:[#allocation6 + $0x20] sm:$0xff]
    %v111 = vld [vmem:[#allocation6 + $0x28] sm:$0xff]
    %v112 = vld [vmem:[#allocation6 + $0x30] sm:$0xff]
    %v113 = vld [vmem:[#allocation6 + $0x38] sm:$0xff]
    %v114 = vld [vmem:[#allocation6 + $0x40] sm:$0xff]
    %v115 = vld [vmem:[#allocation6 + $0x48] sm:$0xff]
    %v116 = vld [vmem:[#allocation6 + $0x50] sm:$0xff]
    %v117 = vld [vmem:[#allocation6 + $0x58] sm:$0xff]
    %v118 = vld [vmem:[#allocation8] sm:$0x3f]
    %v120 = vlaneseq
    %v121 = vshrl.u32 %v120, 7
    %v122 = vsub.s32 0, %v121
    %v123 = vrot.slane %v118, %v122
    %v124 = vlaneseq
    %v125 = vshrl.u32 %v124, 7
    %v126 = vsub.s32 1, %v125
    %v127 = vrot.slane %v118, %v126
    %v128 = vlaneseq
    %v129 = vshrl.u32 %v128, 7
    %v130 = vsub.s32 2, %v129
    %v131 = vrot.slane %v118, %v130
    %v132 = vlaneseq
    %v133 = vshrl.u32 %v132, 7
    %v134 = vsub.s32 3, %v133
    %v135 = vrot.slane %v118, %v134
    %v136 = vlaneseq
    %v137 = vshrl.u32 %v136, 7
    %v138 = vsub.s32 4, %v137
    %v139 = vrot.slane %v118, %v138
    %v140 = vlaneseq
    %v141 = vshrl.u32 %v140, 7
    %v142 = vsub.s32 5, %v141
    %v143 = vrot.slane %v118, %v142
    %v162 = vunpack.c.l.b16 %v106
    %v163 = vunpack.c.h.b16 %v106
    %v164 = vunpack.c.l.b16 %v107
    %v165 = vunpack.c.h.b16 %v107
    %v166 = vunpack.c.l.b16 %v108
    %v167 = vunpack.c.h.b16 %v108
    %v168 = vunpack.c.l.b16 %v109
    %v169 = vunpack.c.h.b16 %v109
    %v170 = vunpack.c.l.b16 %v110
    %v171 = vunpack.c.h.b16 %v110
    %v172 = vunpack.c.l.b16 %v111
    %v173 = vunpack.c.h.b16 %v111
    %v174 = vunpack.c.l.b16 %v112
    %v175 = vunpack.c.h.b16 %v112
    %v176 = vunpack.c.l.b16 %v113
    %v177 = vunpack.c.h.b16 %v113
    %v178 = vunpack.c.l.b16 %v114
    %v179 = vunpack.c.h.b16 %v114
    %v180 = vunpack.c.l.b16 %v115
    %v181 = vunpack.c.h.b16 %v115
    %v182 = vunpack.c.l.b16 %v116
    %v183 = vunpack.c.h.b16 %v116
    %v184 = vunpack.c.l.b16 %v117
    %v185 = vunpack.c.h.b16 %v117
    %v186 = vpack.c.b16 %v168, %v162
    %v187 = vpack.c.b16 %v169, %v163
    %v188 = vpack.c.b16 %v170, %v164
    %v189 = vpack.c.b16 %v171, %v165
    %v190 = vpack.c.b16 %v172, %v166
    %v191 = vpack.c.b16 %v173, %v167
    %v192 = vpack.c.b16 %v180, %v174
    %v193 = vpack.c.b16 %v181, %v175
    %v194 = vpack.c.b16 %v182, %v176
    %v195 = vpack.c.b16 %v183, %v177
    %v196 = vpack.c.b16 %v184, %v178
    %v197 = vpack.c.b16 %v185, %v179
    %vm210 = vcmask 261120
    %v212 = vsel %vm210, %v105, 0
    %214 = vmatprep.subr.bf16.mxu0 %v187
    %215 = vmatpush1.bf16.msra.mxu0 %v186
    %216 = vmatprep.subr.bf16.mxu0 %v193
    %217 = vmatpush1.bf16.msra.mxu0 %v192
    %218 = vmatprep.subr.bf16.mxu0 0
    %219 = vmatpush1.bf16.msra.mxu0 0
    %220 = vmatprep.subr.bf16.mxu0 0
    %221 = vmatpush1.bf16.msra.mxu0 0
    %222 = vmatprep.subr.bf16.mxu0 0
    %223 = vmatpush1.bf16.msra.mxu0 0
    %224 = vmatprep.subr.bf16.mxu0 0
    %225 = vmatpush1.bf16.msra.mxu0 0
    %226 = vmatprep.subr.bf16.mxu0 0
    %227 = vmatpush1.bf16.msra.mxu0 0
    %228 = vmatprep.subr.bf16.mxu0 0
    %229 = vmatpush1.bf16.msra.mxu0 0
    %230 = vmatprep.subr.bf16.mxu0 0
    %231 = vmatpush1.bf16.msra.mxu0 0
    %232 = vmatprep.subr.bf16.mxu0 0
    %233 = vmatpush1.bf16.msra.mxu0 0
    %234 = vmatprep.subr.bf16.mxu0 0
    %235 = vmatpush1.bf16.msra.mxu0 0
    %236 = vmatprep.subr.bf16.mxu0 0
    %237 = vmatpush1.bf16.msra.mxu0 0
    %238 = vmatprep.subr.bf16.mxu0 0
    %239 = vmatpush1.bf16.msra.mxu0 0
    %240 = vmatprep.subr.bf16.mxu0 0
    %241 = vmatpush1.bf16.msra.mxu0 0
    %242 = vmatprep.subr.bf16.mxu0 0
    %243 = vmatpush1.bf16.msra.mxu0 0
    %244 = vmatprep.subr.bf16.mxu0 0
    %245 = vmatpush1.bf16.msra.mxu0 0
    %246 = vmatprep.mubr.bf16.mxu0 0
    %247 = vmatmul.mubr.bf16.gmra.mrb[0].mxu0 %v212
    %v248 = vpop.f32.mrb[0].mxu0
    %v249 = vadd.f32 %v123, %v248
    %v250 = vpop.f32.mrb[0].mxu0
    %v251 = vadd.f32 %v127, %v250
    %v252 = vpop.f32.mrb[0].mxu0
    %v253 = vpop.f32.mrb[0].mxu0
    %254 = vdwg.mxu0
    %255 = vmatprep.subr.bf16.mxu0 %v189
    %256 = vmatpush1.bf16.msra.mxu0 %v188
    %257 = vmatprep.subr.bf16.mxu0 %v195
    %258 = vmatpush1.bf16.msra.mxu0 %v194
    %259 = vmatprep.subr.bf16.mxu0 0
    %260 = vmatpush1.bf16.msra.mxu0 0
    %261 = vmatprep.subr.bf16.mxu0 0
    %262 = vmatpush1.bf16.msra.mxu0 0
    %263 = vmatprep.subr.bf16.mxu0 0
    %264 = vmatpush1.bf16.msra.mxu0 0
    %265 = vmatprep.subr.bf16.mxu0 0
    %266 = vmatpush1.bf16.msra.mxu0 0
    %267 = vmatprep.subr.bf16.mxu0 0
    %268 = vmatpush1.bf16.msra.mxu0 0
    %269 = vmatprep.subr.bf16.mxu0 0
    %270 = vmatpush1.bf16.msra.mxu0 0
    %271 = vmatprep.subr.bf16.mxu0 0
    %272 = vmatpush1.bf16.msra.mxu0 0
    %273 = vmatprep.subr.bf16.mxu0 0
    %274 = vmatpush1.bf16.msra.mxu0 0
    %275 = vmatprep.subr.bf16.mxu0 0
    %276 = vmatpush1.bf16.msra.mxu0 0
    %277 = vmatprep.subr.bf16.mxu0 0
    %278 = vmatpush1.bf16.msra.mxu0 0
    %279 = vmatprep.subr.bf16.mxu0 0
    %280 = vmatpush1.bf16.msra.mxu0 0
    %281 = vmatprep.subr.bf16.mxu0 0
    %282 = vmatpush1.bf16.msra.mxu0 0
    %283 = vmatprep.subr.bf16.mxu0 0
    %284 = vmatpush1.bf16.msra.mxu0 0
    %285 = vmatprep.subr.bf16.mxu0 0
    %286 = vmatpush1.bf16.msra.mxu0 0
    %287 = vmatprep.mubr.bf16.mxu0 0
    %288 = vmatmul.mubr.bf16.gmra.mrb[0].mxu0 %v212
    %v289 = vpop.f32.mrb[0].mxu0
    %v290 = vadd.f32 %v131, %v289
    %v291 = vpop.f32.mrb[0].mxu0
    %v292 = vadd.f32 %v135, %v291
    %v293 = vpop.f32.mrb[0].mxu0
    %v294 = vpop.f32.mrb[0].mxu0
    %295 = vdwg.mxu0
    %296 = vmatprep.subr.bf16.mxu0 %v191
    %297 = vmatpush1.bf16.msra.mxu0 %v190
    %298 = vmatprep.subr.bf16.mxu0 %v197
    %299 = vmatpush1.bf16.msra.mxu0 %v196
    %300 = vmatprep.subr.bf16.mxu0 0
    %301 = vmatpush1.bf16.msra.mxu0 0
    %302 = vmatprep.subr.bf16.mxu0 0
    %303 = vmatpush1.bf16.msra.mxu0 0
    %304 = vmatprep.subr.bf16.mxu0 0
    %305 = vmatpush1.bf16.msra.mxu0 0
    %306 = vmatprep.subr.bf16.mxu0 0
    %307 = vmatpush1.bf16.msra.mxu0 0
    %308 = vmatprep.subr.bf16.mxu0 0
    %309 = vmatpush1.bf16.msra.mxu0 0
    %310 = vmatprep.subr.bf16.mxu0 0
    %311 = vmatpush1.bf16.msra.mxu0 0
    %312 = vmatprep.subr.bf16.mxu0 0
    %313 = vmatpush1.bf16.msra.mxu0 0
    %314 = vmatprep.subr.bf16.mxu0 0
    %315 = vmatpush1.bf16.msra.mxu0 0
    %316 = vmatprep.subr.bf16.mxu0 0
    %317 = vmatpush1.bf16.msra.mxu0 0
    %318 = vmatprep.subr.bf16.mxu0 0
    %319 = vmatpush1.bf16.msra.mxu0 0
    %320 = vmatprep.subr.bf16.mxu0 0
    %321 = vmatpush1.bf16.msra.mxu0 0
    %322 = vmatprep.subr.bf16.mxu0 0
    %323 = vmatpush1.bf16.msra.mxu0 0
    %324 = vmatprep.subr.bf16.mxu0 0
    %325 = vmatpush1.bf16.msra.mxu0 0
    %326 = vmatprep.subr.bf16.mxu0 0
    %327 = vmatpush1.bf16.msra.mxu0 0
    %328 = vmatprep.mubr.bf16.mxu0 0
    %329 = vmatmul.mubr.bf16.gmra.mrb[0].mxu0 %v212
    %v330 = vpop.f32.mrb[0].mxu0
    %v331 = vadd.f32 %v139, %v330
    %v332 = vpop.f32.mrb[0].mxu0
    %v333 = vadd.f32 %v143, %v332
    %v334 = vpop.f32.mrb[0].mxu0
    %v335 = vpop.f32.mrb[0].mxu0
    %336 = vdwg.mxu0
    %v337 = vmul.f32 %v249, %v249
    %v338 = vmul.f32 %v251, %v251
    %v339 = vmul.f32 %v290, %v290
    %v340 = vmul.f32 %v292, %v292
    %v341 = vmul.f32 %v331, %v331
    %v342 = vmul.f32 %v333, %v333
    %v343 = vmul.f32 %v249, %v337
    %v344 = vmul.f32 %v251, %v338
    %v345 = vmul.f32 %v290, %v339
    %v346 = vmul.f32 %v292, %v340
    %v347 = vmul.f32 %v331, %v341
    %v348 = vmul.f32 %v333, %v342
    %v349 = vmul.f32 %v343, 0.044715
    %v350 = vmul.f32 %v344, 0.044715
    %v351 = vmul.f32 %v345, 0.044715
    %v352 = vmul.f32 %v346, 0.044715
    %v353 = vmul.f32 %v347, 0.044715
    %v354 = vmul.f32 %v348, 0.044715
    %v355 = vadd.f32 %v249, %v349
    %v356 = vadd.f32 %v251, %v350
    %v357 = vadd.f32 %v290, %v351
    %v358 = vadd.f32 %v292, %v352
    %v359 = vadd.f32 %v331, %v353
    %v360 = vadd.f32 %v333, %v354
    %v361 = vmul.f32 %v355, 0.7978846
    %v362 = vmul.f32 %v356, 0.7978846
    %v363 = vmul.f32 %v357, 0.7978846
    %v364 = vmul.f32 %v358, 0.7978846
    %v365 = vmul.f32 %v359, 0.7978846
    %v366 = vmul.f32 %v360, 0.7978846
    %v367 = vtanh.pop %v361
    %v368 = vtanh.pop %v362
    %v369 = vtanh.pop %v363
    %v370 = vtanh.pop %v364
    %v371 = vtanh.pop %v365
    %v372 = vtanh.pop %v366
    %v373 = vadd.f32 %v367, 1.0
    %v374 = vadd.f32 %v368, 1.0
    %v375 = vadd.f32 %v369, 1.0
    %v376 = vadd.f32 %v370, 1.0
    %v377 = vadd.f32 %v371, 1.0
    %v378 = vadd.f32 %v372, 1.0
    %v379 = vmul.f32 %v373, 0.5
    %v380 = vmul.f32 %v374, 0.5
    %v381 = vmul.f32 %v375, 0.5
    %v382 = vmul.f32 %v376, 0.5
    %v383 = vmul.f32 %v377, 0.5
    %v384 = vmul.f32 %v378, 0.5
    %v385 = vmul.f32 %v249, %v379
    %v386 = vmul.f32 %v251, %v380
    %v387 = vmul.f32 %v290, %v381
    %v388 = vmul.f32 %v292, %v382
    %v389 = vmul.f32 %v331, %v383
    %v390 = vmul.f32 %v333, %v384
    %v391 = vpack.c.bf16 %v385, %v385
    %v392 = vpack.c.bf16 %v386, %v386
    %v393 = vpack.c.bf16 %v387, %v387
    %v394 = vpack.c.bf16 %v388, %v388
    %v395 = vpack.c.bf16 %v389, %v389
    %v396 = vpack.c.bf16 %v390, %v390
    %v397 = vld [vmem:[#allocation9] sm:$0xff]
    %v398 = vld [vmem:[#allocation9 + $0x8] sm:$0xff]
    %v399 = vld [vmem:[#allocation9 + $0x10] sm:$0xff]
    %v400 = vld [vmem:[#allocation9 + $0x18] sm:$0xff]
    %v401 = vld [vmem:[#allocation9 + $0x20] sm:$0xff]
    %v402 = vld [vmem:[#allocation9 + $0x28] sm:$0xff]
    %v403 = vld [vmem:[#allocation9 + $0x30] sm:$0xff]
    %v404 = vld [vmem:[#allocation9 + $0x38] sm:$0xff]
    %v405 = vld [vmem:[#allocation9 + $0x40] sm:$0xff]
    %v406 = vld [vmem:[#allocation9 + $0x48] sm:$0xff]
    %v407 = vld [vmem:[#allocation9 + $0x50] sm:$0xff]
    %v408 = vld [vmem:[#allocation9 + $0x58] sm:$0xff]
    %v409 = vld [vmem:[#allocation9 + $0x60] sm:$0xff]
    %v410 = vld [vmem:[#allocation9 + $0x68] sm:$0xff]
    %v411 = vld [vmem:[#allocation9 + $0x70] sm:$0xff]
    %v412 = vld [vmem:[#allocation9 + $0x78] sm:$0xff]
    %v413 = vld [vmem:[#allocation9 + $0x80] sm:$0xff]
    %v414 = vld [vmem:[#allocation9 + $0x88] sm:$0xff]
    %v415 = vld [vmem:[#allocation9 + $0x90] sm:$0xff]
    %v416 = vld [vmem:[#allocation9 + $0x98] sm:$0xff]
    %v417 = vld [vmem:[#allocation9 + $0xa0] sm:$0xff]
    %v418 = vld [vmem:[#allocation9 + $0xa8] sm:$0xff]
    %v419 = vld [vmem:[#allocation9 + $0xb0] sm:$0xff]
    %v420 = vld [vmem:[#allocation9 + $0xb8] sm:$0xff]
    %v421 = vld [vmem:[#allocation9 + $0xc0] sm:$0xff]
    %v422 = vld [vmem:[#allocation9 + $0xc8] sm:$0xff]
    %v423 = vld [vmem:[#allocation9 + $0xd0] sm:$0xff]
    %v424 = vld [vmem:[#allocation9 + $0xd8] sm:$0xff]
    %v425 = vld [vmem:[#allocation9 + $0xe0] sm:$0xff]
    %v426 = vld [vmem:[#allocation9 + $0xe8] sm:$0xff]
    %v427 = vld [vmem:[#allocation9 + $0xf0] sm:$0xff]
    %v428 = vld [vmem:[#allocation9 + $0xf8] sm:$0xff]
    %v429 = vld [vmem:[#allocation9 + $0x100] sm:$0xff]
    %v430 = vld [vmem:[#allocation9 + $0x108] sm:$0xff]
    %v431 = vld [vmem:[#allocation9 + $0x110] sm:$0xff]
    %v432 = vld [vmem:[#allocation9 + $0x118] sm:$0xff]
    %v433 = vld [vmem:[#allocation9 + $0x120] sm:$0xff]
    %v434 = vld [vmem:[#allocation9 + $0x128] sm:$0xff]
    %v435 = vld [vmem:[#allocation9 + $0x130] sm:$0xff]
    %v436 = vld [vmem:[#allocation9 + $0x138] sm:$0xff]
    %v437 = vld [vmem:[#allocation9 + $0x140] sm:$0xff]
    %v438 = vld [vmem:[#allocation9 + $0x148] sm:$0xff]
    %v439 = vld [vmem:[#allocation9 + $0x150] sm:$0xff]
    %v440 = vld [vmem:[#allocation9 + $0x158] sm:$0xff]
    %v441 = vld [vmem:[#allocation9 + $0x160] sm:$0xff]
    %v442 = vld [vmem:[#allocation9 + $0x168] sm:$0xff]
    %v443 = vld [vmem:[#allocation9 + $0x170] sm:$0xff]
    %v444 = vld [vmem:[#allocation9 + $0x178] sm:$0xff]
    %v445 = vld [vmem:[#allocation9 + $0x180] sm:$0xff]
    %v446 = vld [vmem:[#allocation9 + $0x188] sm:$0xff]
    %v447 = vld [vmem:[#allocation9 + $0x190] sm:$0xff]
    %v448 = vld [vmem:[#allocation9 + $0x198] sm:$0xff]
    %v449 = vld [vmem:[#allocation9 + $0x1a0] sm:$0xff]
    %v450 = vld [vmem:[#allocation9 + $0x1a8] sm:$0xff]
    %v451 = vld [vmem:[#allocation9 + $0x1b0] sm:$0xff]
    %v452 = vld [vmem:[#allocation9 + $0x1b8] sm:$0xff]
    %v453 = vld [vmem:[#allocation9 + $0x1c0] sm:$0xff]
    %v454 = vld [vmem:[#allocation9 + $0x1c8] sm:$0xff]
    %v455 = vld [vmem:[#allocation9 + $0x1d0] sm:$0xff]
    %v456 = vld [vmem:[#allocation9 + $0x1d8] sm:$0xff]
    %v457 = vld [vmem:[#allocation9 + $0x1e0] sm:$0xff]
    %v458 = vld [vmem:[#allocation9 + $0x1e8] sm:$0xff]
    %v459 = vld [vmem:[#allocation9 + $0x1f0] sm:$0xff]
    %v460 = vld [vmem:[#allocation9 + $0x1f8] sm:$0xff]
    %v461 = vld [vmem:[#allocation9 + $0x200] sm:$0xff]
    %v462 = vld [vmem:[#allocation9 + $0x208] sm:$0xff]
    %v463 = vld [vmem:[#allocation9 + $0x210] sm:$0xff]
    %v464 = vld [vmem:[#allocation9 + $0x218] sm:$0xff]
    %v465 = vld [vmem:[#allocation9 + $0x220] sm:$0xff]
    %v466 = vld [vmem:[#allocation9 + $0x228] sm:$0xff]
    %v467 = vld [vmem:[#allocation9 + $0x230] sm:$0xff]
    %v468 = vld [vmem:[#allocation9 + $0x238] sm:$0xff]
    %v469 = vld [vmem:[#allocation9 + $0x240] sm:$0xff]
    %v470 = vld [vmem:[#allocation9 + $0x248] sm:$0xff]
    %v471 = vld [vmem:[#allocation9 + $0x250] sm:$0xff]
    %v472 = vld [vmem:[#allocation9 + $0x258] sm:$0xff]
    %v473 = vld [vmem:[#allocation9 + $0x260] sm:$0xff]
    %v474 = vld [vmem:[#allocation9 + $0x268] sm:$0xff]
    %v475 = vld [vmem:[#allocation9 + $0x270] sm:$0xff]
    %v476 = vld [vmem:[#allocation9 + $0x278] sm:$0xff]
    %v477 = vld [vmem:[#allocation9 + $0x280] sm:$0xff]
    %v478 = vld [vmem:[#allocation9 + $0x288] sm:$0xff]
    %v479 = vld [vmem:[#allocation9 + $0x290] sm:$0xff]
    %v480 = vld [vmem:[#allocation9 + $0x298] sm:$0xff]
    %v481 = vld [vmem:[#allocation9 + $0x2a0] sm:$0xff]
    %v482 = vld [vmem:[#allocation9 + $0x2a8] sm:$0xff]
    %v483 = vld [vmem:[#allocation9 + $0x2b0] sm:$0xff]
    %v484 = vld [vmem:[#allocation9 + $0x2b8] sm:$0xff]
    %v485 = vld [vmem:[#allocation9 + $0x2c0] sm:$0xff]
    %v486 = vld [vmem:[#allocation9 + $0x2c8] sm:$0xff]
    %v487 = vld [vmem:[#allocation9 + $0x2d0] sm:$0xff]
    %v488 = vld [vmem:[#allocation9 + $0x2d8] sm:$0xff]
    %v489 = vld [vmem:[#allocation9 + $0x2e0] sm:$0xff]
    %v490 = vld [vmem:[#allocation9 + $0x2e8] sm:$0xff]
    %v491 = vld [vmem:[#allocation9 + $0x2f0] sm:$0xff]
    %v492 = vld [vmem:[#allocation9 + $0x2f8] sm:$0xff]
    %v493 = vld [vmem:[#allocation9 + $0x300] sm:$0xff]
    %v494 = vld [vmem:[#allocation9 + $0x308] sm:$0xff]
    %v495 = vld [vmem:[#allocation9 + $0x310] sm:$0xff]
    %v496 = vld [vmem:[#allocation9 + $0x318] sm:$0xff]
    %v497 = vld [vmem:[#allocation9 + $0x320] sm:$0xff]
    %v498 = vld [vmem:[#allocation9 + $0x328] sm:$0xff]
    %v499 = vld [vmem:[#allocation9 + $0x330] sm:$0xff]
    %v500 = vld [vmem:[#allocation9 + $0x338] sm:$0xff]
    %v501 = vld [vmem:[#allocation9 + $0x340] sm:$0xff]
    %v502 = vld [vmem:[#allocation9 + $0x348] sm:$0xff]
    %v503 = vld [vmem:[#allocation9 + $0x350] sm:$0xff]
    %v504 = vld [vmem:[#allocation9 + $0x358] sm:$0xff]
    %v505 = vld [vmem:[#allocation9 + $0x360] sm:$0xff]
    %v506 = vld [vmem:[#allocation9 + $0x368] sm:$0xff]
    %v507 = vld [vmem:[#allocation9 + $0x370] sm:$0xff]
    %v508 = vld [vmem:[#allocation9 + $0x378] sm:$0xff]
    %v509 = vld [vmem:[#allocation9 + $0x380] sm:$0xff]
    %v510 = vld [vmem:[#allocation9 + $0x388] sm:$0xff]
    %v511 = vld [vmem:[#allocation9 + $0x390] sm:$0xff]
    %v512 = vld [vmem:[#allocation9 + $0x398] sm:$0xff]
    %v513 = vld [vmem:[#allocation9 + $0x3a0] sm:$0xff]
    %v514 = vld [vmem:[#allocation9 + $0x3a8] sm:$0xff]
    %v515 = vld [vmem:[#allocation9 + $0x3b0] sm:$0xff]
    %v516 = vld [vmem:[#allocation9 + $0x3b8] sm:$0xff]
    %v517 = vld [vmem:[#allocation9 + $0x3c0] sm:$0xff]
    %v518 = vld [vmem:[#allocation9 + $0x3c8] sm:$0xff]
    %v519 = vld [vmem:[#allocation9 + $0x3d0] sm:$0xff]
    %v520 = vld [vmem:[#allocation9 + $0x3d8] sm:$0xff]
    %v521 = vld [vmem:[#allocation9 + $0x3e0] sm:$0xff]
    %v522 = vld [vmem:[#allocation9 + $0x3e8] sm:$0xff]
    %v523 = vld [vmem:[#allocation9 + $0x3f0] sm:$0xff]
    %v524 = vld [vmem:[#allocation9 + $0x3f8] sm:$0xff]
    %v525 = vld [vmem:[#allocation9 + $0x400] sm:$0xff]
    %v526 = vld [vmem:[#allocation9 + $0x408] sm:$0xff]
    %v527 = vld [vmem:[#allocation9 + $0x410] sm:$0xff]
    %v528 = vld [vmem:[#allocation9 + $0x418] sm:$0xff]
    %v529 = vld [vmem:[#allocation9 + $0x420] sm:$0xff]
    %v530 = vld [vmem:[#allocation9 + $0x428] sm:$0xff]
    %v531 = vld [vmem:[#allocation9 + $0x430] sm:$0xff]
    %v532 = vld [vmem:[#allocation9 + $0x438] sm:$0xff]
    %v533 = vld [vmem:[#allocation9 + $0x440] sm:$0xff]
    %v534 = vld [vmem:[#allocation9 + $0x448] sm:$0xff]
    %v535 = vld [vmem:[#allocation9 + $0x450] sm:$0xff]
    %v536 = vld [vmem:[#allocation9 + $0x458] sm:$0xff]
    %v537 = vld [vmem:[#allocation9 + $0x460] sm:$0xff]
    %v538 = vld [vmem:[#allocation9 + $0x468] sm:$0xff]
    %v539 = vld [vmem:[#allocation9 + $0x470] sm:$0xff]
    %v540 = vld [vmem:[#allocation9 + $0x478] sm:$0xff]
    %v541 = vld [vmem:[#allocation9 + $0x480] sm:$0xff]
    %v542 = vld [vmem:[#allocation9 + $0x488] sm:$0xff]
    %v543 = vld [vmem:[#allocation9 + $0x490] sm:$0xff]
    %v544 = vld [vmem:[#allocation9 + $0x498] sm:$0xff]
    %v545 = vld [vmem:[#allocation9 + $0x4a0] sm:$0xff]
    %v546 = vld [vmem:[#allocation9 + $0x4a8] sm:$0xff]
    %v547 = vld [vmem:[#allocation9 + $0x4b0] sm:$0xff]
    %v548 = vld [vmem:[#allocation9 + $0x4b8] sm:$0xff]
    %v549 = vld [vmem:[#allocation9 + $0x4c0] sm:$0xff]
    %v550 = vld [vmem:[#allocation9 + $0x4c8] sm:$0xff]
    %v551 = vld [vmem:[#allocation9 + $0x4d0] sm:$0xff]
    %v552 = vld [vmem:[#allocation9 + $0x4d8] sm:$0xff]
    %v553 = vld [vmem:[#allocation9 + $0x4e0] sm:$0xff]
    %v554 = vld [vmem:[#allocation9 + $0x4e8] sm:$0xff]
    %v555 = vld [vmem:[#allocation9 + $0x4f0] sm:$0xff]
    %v556 = vld [vmem:[#allocation9 + $0x4f8] sm:$0xff]
    %v557 = vld [vmem:[#allocation9 + $0x500] sm:$0xff]
    %v558 = vld [vmem:[#allocation9 + $0x508] sm:$0xff]
    %v559 = vld [vmem:[#allocation9 + $0x510] sm:$0xff]
    %v560 = vld [vmem:[#allocation9 + $0x518] sm:$0xff]
    %v561 = vld [vmem:[#allocation9 + $0x520] sm:$0xff]
    %v562 = vld [vmem:[#allocation9 + $0x528] sm:$0xff]
    %v563 = vld [vmem:[#allocation9 + $0x530] sm:$0xff]
    %v564 = vld [vmem:[#allocation9 + $0x538] sm:$0xff]
    %v565 = vld [vmem:[#allocation9 + $0x540] sm:$0xff]
    %v566 = vld [vmem:[#allocation9 + $0x548] sm:$0xff]
    %v567 = vld [vmem:[#allocation9 + $0x550] sm:$0xff]
    %v568 = vld [vmem:[#allocation9 + $0x558] sm:$0xff]
    %v569 = vld [vmem:[#allocation9 + $0x560] sm:$0xff]
    %v570 = vld [vmem:[#allocation9 + $0x568] sm:$0xff]
    %v571 = vld [vmem:[#allocation9 + $0x570] sm:$0xff]
    %v572 = vld [vmem:[#allocation9 + $0x578] sm:$0xff]
    %v573 = vld [vmem:[#allocation9 + $0x580] sm:$0xff]
    %v574 = vld [vmem:[#allocation9 + $0x588] sm:$0xff]
    %v575 = vld [vmem:[#allocation9 + $0x590] sm:$0xff]
    %v576 = vld [vmem:[#allocation9 + $0x598] sm:$0xff]
    %v577 = vld [vmem:[#allocation9 + $0x5a0] sm:$0xff]
    %v578 = vld [vmem:[#allocation9 + $0x5a8] sm:$0xff]
    %v579 = vld [vmem:[#allocation9 + $0x5b0] sm:$0xff]
    %v580 = vld [vmem:[#allocation9 + $0x5b8] sm:$0xff]
    %v581 = vld [vmem:[#allocation9 + $0x5c0] sm:$0xff]
    %v582 = vld [vmem:[#allocation9 + $0x5c8] sm:$0xff]
    %v583 = vld [vmem:[#allocation9 + $0x5d0] sm:$0xff]
    %v584 = vld [vmem:[#allocation9 + $0x5d8] sm:$0xff]
    %v585 = vld [vmem:[#allocation9 + $0x5e0] sm:$0xff]
    %v586 = vld [vmem:[#allocation9 + $0x5e8] sm:$0xff]
    %v587 = vld [vmem:[#allocation9 + $0x5f0] sm:$0xff]
    %v588 = vld [vmem:[#allocation9 + $0x5f8] sm:$0xff]
    %v589 = vld [vmem:[#allocation9 + $0x600] sm:$0xff]
    %v590 = vld [vmem:[#allocation9 + $0x608] sm:$0xff]
    %v591 = vld [vmem:[#allocation9 + $0x610] sm:$0xff]
    %v592 = vld [vmem:[#allocation9 + $0x618] sm:$0xff]
    %v593 = vld [vmem:[#allocation9 + $0x620] sm:$0xff]
    %v594 = vld [vmem:[#allocation9 + $0x628] sm:$0xff]
    %v595 = vld [vmem:[#allocation9 + $0x630] sm:$0xff]
    %v596 = vld [vmem:[#allocation9 + $0x638] sm:$0xff]
    %v597 = vld [vmem:[#allocation9 + $0x640] sm:$0xff]
    %v598 = vld [vmem:[#allocation9 + $0x648] sm:$0xff]
    %v599 = vld [vmem:[#allocation9 + $0x650] sm:$0xff]
    %v600 = vld [vmem:[#allocation9 + $0x658] sm:$0xff]
    %v601 = vld [vmem:[#allocation9 + $0x660] sm:$0xff]
    %v602 = vld [vmem:[#allocation9 + $0x668] sm:$0xff]
    %v603 = vld [vmem:[#allocation9 + $0x670] sm:$0xff]
    %v604 = vld [vmem:[#allocation9 + $0x678] sm:$0xff]
    %v605 = vld [vmem:[#allocation9 + $0x680] sm:$0xff]
    %v606 = vld [vmem:[#allocation9 + $0x688] sm:$0xff]
    %v607 = vld [vmem:[#allocation9 + $0x690] sm:$0xff]
    %v608 = vld [vmem:[#allocation9 + $0x698] sm:$0xff]
    %v609 = vld [vmem:[#allocation9 + $0x6a0] sm:$0xff]
    %v610 = vld [vmem:[#allocation9 + $0x6a8] sm:$0xff]
    %v611 = vld [vmem:[#allocation9 + $0x6b0] sm:$0xff]
    %v612 = vld [vmem:[#allocation9 + $0x6b8] sm:$0xff]
    %v613 = vld [vmem:[#allocation9 + $0x6c0] sm:$0xff]
    %v614 = vld [vmem:[#allocation9 + $0x6c8] sm:$0xff]
    %v615 = vld [vmem:[#allocation9 + $0x6d0] sm:$0xff]
    %v616 = vld [vmem:[#allocation9 + $0x6d8] sm:$0xff]
    %v617 = vld [vmem:[#allocation9 + $0x6e0] sm:$0xff]
    %v618 = vld [vmem:[#allocation9 + $0x6e8] sm:$0xff]
    %v619 = vld [vmem:[#allocation9 + $0x6f0] sm:$0xff]
    %v620 = vld [vmem:[#allocation9 + $0x6f8] sm:$0xff]
    %v621 = vld [vmem:[#allocation9 + $0x700] sm:$0xff]
    %v622 = vld [vmem:[#allocation9 + $0x708] sm:$0xff]
    %v623 = vld [vmem:[#allocation9 + $0x710] sm:$0xff]
    %v624 = vld [vmem:[#allocation9 + $0x718] sm:$0xff]
    %v625 = vld [vmem:[#allocation9 + $0x720] sm:$0xff]
    %v626 = vld [vmem:[#allocation9 + $0x728] sm:$0xff]
    %v627 = vld [vmem:[#allocation9 + $0x730] sm:$0xff]
    %v628 = vld [vmem:[#allocation9 + $0x738] sm:$0xff]
    %v629 = vld [vmem:[#allocation9 + $0x740] sm:$0xff]
    %v630 = vld [vmem:[#allocation9 + $0x748] sm:$0xff]
    %v631 = vld [vmem:[#allocation9 + $0x750] sm:$0xff]
    %v632 = vld [vmem:[#allocation9 + $0x758] sm:$0xff]
    %v633 = vld [vmem:[#allocation9 + $0x760] sm:$0xff]
    %v634 = vld [vmem:[#allocation9 + $0x768] sm:$0xff]
    %v635 = vld [vmem:[#allocation9 + $0x770] sm:$0xff]
    %v636 = vld [vmem:[#allocation9 + $0x778] sm:$0xff]
    %v637 = vld [vmem:[#allocation9 + $0x780] sm:$0xff]
    %v638 = vld [vmem:[#allocation9 + $0x788] sm:$0xff]
    %v639 = vld [vmem:[#allocation9 + $0x790] sm:$0xff]
    %v640 = vld [vmem:[#allocation9 + $0x798] sm:$0xff]
    %v641 = vld [vmem:[#allocation9 + $0x7a0] sm:$0xff]
    %v642 = vld [vmem:[#allocation9 + $0x7a8] sm:$0xff]
    %v643 = vld [vmem:[#allocation9 + $0x7b0] sm:$0xff]
    %v644 = vld [vmem:[#allocation9 + $0x7b8] sm:$0xff]
    %v645 = vld [vmem:[#allocation9 + $0x7c0] sm:$0xff]
    %v646 = vld [vmem:[#allocation9 + $0x7c8] sm:$0xff]
    %v647 = vld [vmem:[#allocation9 + $0x7d0] sm:$0xff]
    %v648 = vld [vmem:[#allocation9 + $0x7d8] sm:$0xff]
    %v649 = vld [vmem:[#allocation9 + $0x7e0] sm:$0xff]
    %v650 = vld [vmem:[#allocation9 + $0x7e8] sm:$0xff]
    %v651 = vld [vmem:[#allocation9 + $0x7f0] sm:$0xff]
    %v652 = vld [vmem:[#allocation9 + $0x7f8] sm:$0xff]
    %v653 = vld [vmem:[#allocation9 + $0x800] sm:$0xff]
    %v654 = vld [vmem:[#allocation9 + $0x808] sm:$0xff]
    %v655 = vld [vmem:[#allocation9 + $0x810] sm:$0xff]
    %v656 = vld [vmem:[#allocation9 + $0x818] sm:$0xff]
    %v657 = vld [vmem:[#allocation9 + $0x820] sm:$0xff]
    %v658 = vld [vmem:[#allocation9 + $0x828] sm:$0xff]
    %v659 = vld [vmem:[#allocation9 + $0x830] sm:$0xff]
    %v660 = vld [vmem:[#allocation9 + $0x838] sm:$0xff]
    %v661 = vld [vmem:[#allocation9 + $0x840] sm:$0xff]
    %v662 = vld [vmem:[#allocation9 + $0x848] sm:$0xff]
    %v663 = vld [vmem:[#allocation9 + $0x850] sm:$0xff]
    %v664 = vld [vmem:[#allocation9 + $0x858] sm:$0xff]
    %v665 = vld [vmem:[#allocation9 + $0x860] sm:$0xff]
    %v666 = vld [vmem:[#allocation9 + $0x868] sm:$0xff]
    %v667 = vld [vmem:[#allocation9 + $0x870] sm:$0xff]
    %v668 = vld [vmem:[#allocation9 + $0x878] sm:$0xff]
    %v669 = vld [vmem:[#allocation9 + $0x880] sm:$0xff]
    %v670 = vld [vmem:[#allocation9 + $0x888] sm:$0xff]
    %v671 = vld [vmem:[#allocation9 + $0x890] sm:$0xff]
    %v672 = vld [vmem:[#allocation9 + $0x898] sm:$0xff]
    %v673 = vld [vmem:[#allocation9 + $0x8a0] sm:$0xff]
    %v674 = vld [vmem:[#allocation9 + $0x8a8] sm:$0xff]
    %v675 = vld [vmem:[#allocation9 + $0x8b0] sm:$0xff]
    %v676 = vld [vmem:[#allocation9 + $0x8b8] sm:$0xff]
    %v677 = vld [vmem:[#allocation9 + $0x8c0] sm:$0xff]
    %v678 = vld [vmem:[#allocation9 + $0x8c8] sm:$0xff]
    %v679 = vld [vmem:[#allocation9 + $0x8d0] sm:$0xff]
    %v680 = vld [vmem:[#allocation9 + $0x8d8] sm:$0xff]
    %v681 = vld [vmem:[#allocation9 + $0x8e0] sm:$0xff]
    %v682 = vld [vmem:[#allocation9 + $0x8e8] sm:$0xff]
    %v683 = vld [vmem:[#allocation9 + $0x8f0] sm:$0xff]
    %v684 = vld [vmem:[#allocation9 + $0x8f8] sm:$0xff]
    %v685 = vld [vmem:[#allocation11] sm:$0x3f]
    %v687 = vlaneseq
    %v688 = vshrl.u32 %v687, 7
    %v689 = vsub.s32 0, %v688
    %v690 = vrot.slane %v685, %v689
    %v691 = vlaneseq
    %v692 = vshrl.u32 %v691, 7
    %v693 = vsub.s32 1, %v692
    %v694 = vrot.slane %v685, %v693
    %v695 = vlaneseq
    %v696 = vshrl.u32 %v695, 7
    %v697 = vsub.s32 2, %v696
    %v698 = vrot.slane %v685, %v697
    %v699 = vlaneseq
    %v700 = vshrl.u32 %v699, 7
    %v701 = vsub.s32 3, %v700
    %v702 = vrot.slane %v685, %v701
    %v703 = vlaneseq
    %v704 = vshrl.u32 %v703, 7
    %v705 = vsub.s32 4, %v704
    %v706 = vrot.slane %v685, %v705
    %v707 = vlaneseq
    %v708 = vshrl.u32 %v707, 7
    %v709 = vsub.s32 5, %v708
    %v710 = vrot.slane %v685, %v709
    %v1005 = vunpack.c.l.b16 %v397
    %v1006 = vunpack.c.h.b16 %v397
    %v1007 = vunpack.c.l.b16 %v398
    %v1008 = vunpack.c.h.b16 %v398
    %v1009 = vunpack.c.l.b16 %v399
    %v1010 = vunpack.c.h.b16 %v399
    %v1011 = vunpack.c.l.b16 %v400
    %v1012 = vunpack.c.h.b16 %v400
    %v1013 = vunpack.c.l.b16 %v401
    %v1014 = vunpack.c.h.b16 %v401
    %v1015 = vunpack.c.l.b16 %v402
    %v1016 = vunpack.c.h.b16 %v402
    %v1017 = vunpack.c.l.b16 %v403
    %v1018 = vunpack.c.h.b16 %v403
    %v1019 = vunpack.c.l.b16 %v404
    %v1020 = vunpack.c.h.b16 %v404
    %v1021 = vunpack.c.l.b16 %v405
    %v1022 = vunpack.c.h.b16 %v405
    %v1023 = vunpack.c.l.b16 %v406
    %v1024 = vunpack.c.h.b16 %v406
    %v1025 = vunpack.c.l.b16 %v407
    %v1026 = vunpack.c.h.b16 %v407
    %v1027 = vunpack.c.l.b16 %v408
    %v1028 = vunpack.c.h.b16 %v408
    %v1029 = vunpack.c.l.b16 %v409
    %v1030 = vunpack.c.h.b16 %v409
    %v1031 = vunpack.c.l.b16 %v410
    %v1032 = vunpack.c.h.b16 %v410
    %v1033 = vunpack.c.l.b16 %v411
    %v1034 = vunpack.c.h.b16 %v411
    %v1035 = vunpack.c.l.b16 %v412
    %v1036 = vunpack.c.h.b16 %v412
    %v1037 = vunpack.c.l.b16 %v413
    %v1038 = vunpack.c.h.b16 %v413
    %v1039 = vunpack.c.l.b16 %v414
    %v1040 = vunpack.c.h.b16 %v414
    %v1041 = vunpack.c.l.b16 %v415
    %v1042 = vunpack.c.h.b16 %v415
    %v1043 = vunpack.c.l.b16 %v416
    %v1044 = vunpack.c.h.b16 %v416
    %v1045 = vunpack.c.l.b16 %v417
    %v1046 = vunpack.c.h.b16 %v417
    %v1047 = vunpack.c.l.b16 %v418
    %v1048 = vunpack.c.h.b16 %v418
    %v1049 = vunpack.c.l.b16 %v419
    %v1050 = vunpack.c.h.b16 %v419
    %v1051 = vunpack.c.l.b16 %v420
    %v1052 = vunpack.c.h.b16 %v420
    %v1053 = vunpack.c.l.b16 %v421
    %v1054 = vunpack.c.h.b16 %v421
    %v1055 = vunpack.c.l.b16 %v422
    %v1056 = vunpack.c.h.b16 %v422
    %v1057 = vunpack.c.l.b16 %v423
    %v1058 = vunpack.c.h.b16 %v423
    %v1059 = vunpack.c.l.b16 %v424
    %v1060 = vunpack.c.h.b16 %v424
    %v1061 = vunpack.c.l.b16 %v425
    %v1062 = vunpack.c.h.b16 %v425
    %v1063 = vunpack.c.l.b16 %v426
    %v1064 = vunpack.c.h.b16 %v426
    %v1065 = vunpack.c.l.b16 %v427
    %v1066 = vunpack.c.h.b16 %v427
    %v1067 = vunpack.c.l.b16 %v428
    %v1068 = vunpack.c.h.b16 %v428
    %v1069 = vunpack.c.l.b16 %v429
    %v1070 = vunpack.c.h.b16 %v429
    %v1071 = vunpack.c.l.b16 %v430
    %v1072 = vunpack.c.h.b16 %v430
    %v1073 = vunpack.c.l.b16 %v431
    %v1074 = vunpack.c.h.b16 %v431
    %v1075 = vunpack.c.l.b16 %v432
    %v1076 = vunpack.c.h.b16 %v432
    %v1077 = vunpack.c.l.b16 %v433
    %v1078 = vunpack.c.h.b16 %v433
    %v1079 = vunpack.c.l.b16 %v434
    %v1080 = vunpack.c.h.b16 %v434
    %v1081 = vunpack.c.l.b16 %v435
    %v1082 = vunpack.c.h.b16 %v435
    %v1083 = vunpack.c.l.b16 %v436
    %v1084 = vunpack.c.h.b16 %v436
    %v1085 = vunpack.c.l.b16 %v437
    %v1086 = vunpack.c.h.b16 %v437
    %v1087 = vunpack.c.l.b16 %v438
    %v1088 = vunpack.c.h.b16 %v438
    %v1089 = vunpack.c.l.b16 %v439
    %v1090 = vunpack.c.h.b16 %v439
    %v1091 = vunpack.c.l.b16 %v440
    %v1092 = vunpack.c.h.b16 %v440
    %v1093 = vunpack.c.l.b16 %v441
    %v1094 = vunpack.c.h.b16 %v441
    %v1095 = vunpack.c.l.b16 %v442
    %v1096 = vunpack.c.h.b16 %v442
    %v1097 = vunpack.c.l.b16 %v443
    %v1098 = vunpack.c.h.b16 %v443
    %v1099 = vunpack.c.l.b16 %v444
    %v1100 = vunpack.c.h.b16 %v444
    %v1101 = vunpack.c.l.b16 %v445
    %v1102 = vunpack.c.h.b16 %v445
    %v1103 = vunpack.c.l.b16 %v446
    %v1104 = vunpack.c.h.b16 %v446
    %v1105 = vunpack.c.l.b16 %v447
    %v1106 = vunpack.c.h.b16 %v447
    %v1107 = vunpack.c.l.b16 %v448
    %v1108 = vunpack.c.h.b16 %v448
    %v1109 = vunpack.c.l.b16 %v449
    %v1110 = vunpack.c.h.b16 %v449
    %v1111 = vunpack.c.l.b16 %v450
    %v1112 = vunpack.c.h.b16 %v450
    %v1113 = vunpack.c.l.b16 %v451
    %v1114 = vunpack.c.h.b16 %v451
    %v1115 = vunpack.c.l.b16 %v452
    %v1116 = vunpack.c.h.b16 %v452
    %v1117 = vunpack.c.l.b16 %v453
    %v1118 = vunpack.c.h.b16 %v453
    %v1119 = vunpack.c.l.b16 %v454
    %v1120 = vunpack.c.h.b16 %v454
    %v1121 = vunpack.c.l.b16 %v455
    %v1122 = vunpack.c.h.b16 %v455
    %v1123 = vunpack.c.l.b16 %v456
    %v1124 = vunpack.c.h.b16 %v456
    %v1125 = vunpack.c.l.b16 %v457
    %v1126 = vunpack.c.h.b16 %v457
    %v1127 = vunpack.c.l.b16 %v458
    %v1128 = vunpack.c.h.b16 %v458
    %v1129 = vunpack.c.l.b16 %v459
    %v1130 = vunpack.c.h.b16 %v459
    %v1131 = vunpack.c.l.b16 %v460
    %v1132 = vunpack.c.h.b16 %v460
    %v1133 = vunpack.c.l.b16 %v461
    %v1134 = vunpack.c.h.b16 %v461
    %v1135 = vunpack.c.l.b16 %v462
    %v1136 = vunpack.c.h.b16 %v462
    %v1137 = vunpack.c.l.b16 %v463
    %v1138 = vunpack.c.h.b16 %v463
    %v1139 = vunpack.c.l.b16 %v464
    %v1140 = vunpack.c.h.b16 %v464
    %v1141 = vunpack.c.l.b16 %v465
    %v1142 = vunpack.c.h.b16 %v465
    %v1143 = vunpack.c.l.b16 %v466
    %v1144 = vunpack.c.h.b16 %v466
    %v1145 = vunpack.c.l.b16 %v467
    %v1146 = vunpack.c.h.b16 %v467
    %v1147 = vunpack.c.l.b16 %v468
    %v1148 = vunpack.c.h.b16 %v468
    %v1149 = vunpack.c.l.b16 %v469
    %v1150 = vunpack.c.h.b16 %v469
    %v1151 = vunpack.c.l.b16 %v470
    %v1152 = vunpack.c.h.b16 %v470
    %v1153 = vunpack.c.l.b16 %v471
    %v1154 = vunpack.c.h.b16 %v471
    %v1155 = vunpack.c.l.b16 %v472
    %v1156 = vunpack.c.h.b16 %v472
    %v1157 = vunpack.c.l.b16 %v473
    %v1158 = vunpack.c.h.b16 %v473
    %v1159 = vunpack.c.l.b16 %v474
    %v1160 = vunpack.c.h.b16 %v474
    %v1161 = vunpack.c.l.b16 %v475
    %v1162 = vunpack.c.h.b16 %v475
    %v1163 = vunpack.c.l.b16 %v476
    %v1164 = vunpack.c.h.b16 %v476
    %v1165 = vunpack.c.l.b16 %v477
    %v1166 = vunpack.c.h.b16 %v477
    %v1167 = vunpack.c.l.b16 %v478
    %v1168 = vunpack.c.h.b16 %v478
    %v1169 = vunpack.c.l.b16 %v479
    %v1170 = vunpack.c.h.b16 %v479
    %v1171 = vunpack.c.l.b16 %v480
    %v1172 = vunpack.c.h.b16 %v480
    %v1173 = vunpack.c.l.b16 %v481
    %v1174 = vunpack.c.h.b16 %v481
    %v1175 = vunpack.c.l.b16 %v482
    %v1176 = vunpack.c.h.b16 %v482
    %v1177 = vunpack.c.l.b16 %v483
    %v1178 = vunpack.c.h.b16 %v483
    %v1179 = vunpack.c.l.b16 %v484
    %v1180 = vunpack.c.h.b16 %v484
    %v1181 = vunpack.c.l.b16 %v485
    %v1182 = vunpack.c.h.b16 %v485
    %v1183 = vunpack.c.l.b16 %v486
    %v1184 = vunpack.c.h.b16 %v486
    %v1185 = vunpack.c.l.b16 %v487
    %v1186 = vunpack.c.h.b16 %v487
    %v1187 = vunpack.c.l.b16 %v488
    %v1188 = vunpack.c.h.b16 %v488
    %v1189 = vunpack.c.l.b16 %v489
    %v1190 = vunpack.c.h.b16 %v489
    %v1191 = vunpack.c.l.b16 %v490
    %v1192 = vunpack.c.h.b16 %v490
    %v1193 = vunpack.c.l.b16 %v491
    %v1194 = vunpack.c.h.b16 %v491
    %v1195 = vunpack.c.l.b16 %v492
    %v1196 = vunpack.c.h.b16 %v492
    %v1197 = vunpack.c.l.b16 %v493
    %v1198 = vunpack.c.h.b16 %v493
    %v1199 = vunpack.c.l.b16 %v494
    %v1200 = vunpack.c.h.b16 %v494
    %v1201 = vunpack.c.l.b16 %v495
    %v1202 = vunpack.c.h.b16 %v495
    %v1203 = vunpack.c.l.b16 %v496
    %v1204 = vunpack.c.h.b16 %v496
    %v1205 = vunpack.c.l.b16 %v497
    %v1206 = vunpack.c.h.b16 %v497
    %v1207 = vunpack.c.l.b16 %v498
    %v1208 = vunpack.c.h.b16 %v498
    %v1209 = vunpack.c.l.b16 %v499
    %v1210 = vunpack.c.h.b16 %v499
    %v1211 = vunpack.c.l.b16 %v500
    %v1212 = vunpack.c.h.b16 %v500
    %v1213 = vunpack.c.l.b16 %v501
    %v1214 = vunpack.c.h.b16 %v501
    %v1215 = vunpack.c.l.b16 %v502
    %v1216 = vunpack.c.h.b16 %v502
    %v1217 = vunpack.c.l.b16 %v503
    %v1218 = vunpack.c.h.b16 %v503
    %v1219 = vunpack.c.l.b16 %v504
    %v1220 = vunpack.c.h.b16 %v504
    %v1221 = vunpack.c.l.b16 %v505
    %v1222 = vunpack.c.h.b16 %v505
    %v1223 = vunpack.c.l.b16 %v506
    %v1224 = vunpack.c.h.b16 %v506
    %v1225 = vunpack.c.l.b16 %v507
    %v1226 = vunpack.c.h.b16 %v507
    %v1227 = vunpack.c.l.b16 %v508
    %v1228 = vunpack.c.h.b16 %v508
    %v1229 = vunpack.c.l.b16 %v509
    %v1230 = vunpack.c.h.b16 %v509
    %v1231 = vunpack.c.l.b16 %v510
    %v1232 = vunpack.c.h.b16 %v510
    %v1233 = vunpack.c.l.b16 %v511
    %v1234 = vunpack.c.h.b16 %v511
    %v1235 = vunpack.c.l.b16 %v512
    %v1236 = vunpack.c.h.b16 %v512
    %v1237 = vunpack.c.l.b16 %v513
    %v1238 = vunpack.c.h.b16 %v513
    %v1239 = vunpack.c.l.b16 %v514
    %v1240 = vunpack.c.h.b16 %v514
    %v1241 = vunpack.c.l.b16 %v515
    %v1242 = vunpack.c.h.b16 %v515
    %v1243 = vunpack.c.l.b16 %v516
    %v1244 = vunpack.c.h.b16 %v516
    %v1245 = vunpack.c.l.b16 %v517
    %v1246 = vunpack.c.h.b16 %v517
    %v1247 = vunpack.c.l.b16 %v518
    %v1248 = vunpack.c.h.b16 %v518
    %v1249 = vunpack.c.l.b16 %v519
    %v1250 = vunpack.c.h.b16 %v519
    %v1251 = vunpack.c.l.b16 %v520
    %v1252 = vunpack.c.h.b16 %v520
    %v1253 = vunpack.c.l.b16 %v521
    %v1254 = vunpack.c.h.b16 %v521
    %v1255 = vunpack.c.l.b16 %v522
    %v1256 = vunpack.c.h.b16 %v522
    %v1257 = vunpack.c.l.b16 %v523
    %v1258 = vunpack.c.h.b16 %v523
    %v1259 = vunpack.c.l.b16 %v524
    %v1260 = vunpack.c.h.b16 %v524
    %v1261 = vunpack.c.l.b16 %v525
    %v1262 = vunpack.c.h.b16 %v525
    %v1263 = vunpack.c.l.b16 %v526
    %v1264 = vunpack.c.h.b16 %v526
    %v1265 = vunpack.c.l.b16 %v527
    %v1266 = vunpack.c.h.b16 %v527
    %v1267 = vunpack.c.l.b16 %v528
    %v1268 = vunpack.c.h.b16 %v528
    %v1269 = vunpack.c.l.b16 %v529
    %v1270 = vunpack.c.h.b16 %v529
    %v1271 = vunpack.c.l.b16 %v530
    %v1272 = vunpack.c.h.b16 %v530
    %v1273 = vunpack.c.l.b16 %v531
    %v1274 = vunpack.c.h.b16 %v531
    %v1275 = vunpack.c.l.b16 %v532
    %v1276 = vunpack.c.h.b16 %v532
    %v1277 = vunpack.c.l.b16 %v533
    %v1278 = vunpack.c.h.b16 %v533
    %v1279 = vunpack.c.l.b16 %v534
    %v1280 = vunpack.c.h.b16 %v534
    %v1281 = vunpack.c.l.b16 %v535
    %v1282 = vunpack.c.h.b16 %v535
    %v1283 = vunpack.c.l.b16 %v536
    %v1284 = vunpack.c.h.b16 %v536
    %v1285 = vunpack.c.l.b16 %v537
    %v1286 = vunpack.c.h.b16 %v537
    %v1287 = vunpack.c.l.b16 %v538
    %v1288 = vunpack.c.h.b16 %v538
    %v1289 = vunpack.c.l.b16 %v539
    %v1290 = vunpack.c.h.b16 %v539
    %v1291 = vunpack.c.l.b16 %v540
    %v1292 = vunpack.c.h.b16 %v540
    %v1293 = vunpack.c.l.b16 %v541
    %v1294 = vunpack.c.h.b16 %v541
    %v1295 = vunpack.c.l.b16 %v542
    %v1296 = vunpack.c.h.b16 %v542
    %v1297 = vunpack.c.l.b16 %v543
    %v1298 = vunpack.c.h.b16 %v543
    %v1299 = vunpack.c.l.b16 %v544
    %v1300 = vunpack.c.h.b16 %v544
    %v1301 = vunpack.c.l.b16 %v545
    %v1302 = vunpack.c.h.b16 %v545
    %v1303 = vunpack.c.l.b16 %v546
    %v1304 = vunpack.c.h.b16 %v546
    %v1305 = vunpack.c.l.b16 %v547
    %v1306 = vunpack.c.h.b16 %v547
    %v1307 = vunpack.c.l.b16 %v548
    %v1308 = vunpack.c.h.b16 %v548
    %v1309 = vunpack.c.l.b16 %v549
    %v1310 = vunpack.c.h.b16 %v549
    %v1311 = vunpack.c.l.b16 %v550
    %v1312 = vunpack.c.h.b16 %v550
    %v1313 = vunpack.c.l.b16 %v551
    %v1314 = vunpack.c.h.b16 %v551
    %v1315 = vunpack.c.l.b16 %v552
    %v1316 = vunpack.c.h.b16 %v552
    %v1317 = vunpack.c.l.b16 %v553
    %v1318 = vunpack.c.h.b16 %v553
    %v1319 = vunpack.c.l.b16 %v554
    %v1320 = vunpack.c.h.b16 %v554
    %v1321 = vunpack.c.l.b16 %v555
    %v1322 = vunpack.c.h.b16 %v555
    %v1323 = vunpack.c.l.b16 %v556
    %v1324 = vunpack.c.h.b16 %v556
    %v1325 = vunpack.c.l.b16 %v557
    %v1326 = vunpack.c.h.b16 %v557
    %v1327 = vunpack.c.l.b16 %v558
    %v1328 = vunpack.c.h.b16 %v558
    %v1329 = vunpack.c.l.b16 %v559
    %v1330 = vunpack.c.h.b16 %v559
    %v1331 = vunpack.c.l.b16 %v560
    %v1332 = vunpack.c.h.b16 %v560
    %v1333 = vunpack.c.l.b16 %v561
    %v1334 = vunpack.c.h.b16 %v561
    %v1335 = vunpack.c.l.b16 %v562
    %v1336 = vunpack.c.h.b16 %v562
    %v1337 = vunpack.c.l.b16 %v563
    %v1338 = vunpack.c.h.b16 %v563
    %v1339 = vunpack.c.l.b16 %v564
    %v1340 = vunpack.c.h.b16 %v564
    %v1341 = vunpack.c.l.b16 %v565
    %v1342 = vunpack.c.h.b16 %v565
    %v1343 = vunpack.c.l.b16 %v566
    %v1344 = vunpack.c.h.b16 %v566
    %v1345 = vunpack.c.l.b16 %v567
    %v1346 = vunpack.c.h.b16 %v567
    %v1347 = vunpack.c.l.b16 %v568
    %v1348 = vunpack.c.h.b16 %v568
    %v1349 = vunpack.c.l.b16 %v569
    %v1350 = vunpack.c.h.b16 %v569
    %v1351 = vunpack.c.l.b16 %v570
    %v1352 = vunpack.c.h.b16 %v570
    %v1353 = vunpack.c.l.b16 %v571
    %v1354 = vunpack.c.h.b16 %v571
    %v1355 = vunpack.c.l.b16 %v572
    %v1356 = vunpack.c.h.b16 %v572
    %v1357 = vunpack.c.l.b16 %v573
    %v1358 = vunpack.c.h.b16 %v573
    %v1359 = vunpack.c.l.b16 %v574
    %v1360 = vunpack.c.h.b16 %v574
    %v1361 = vunpack.c.l.b16 %v575
    %v1362 = vunpack.c.h.b16 %v575
    %v1363 = vunpack.c.l.b16 %v576
    %v1364 = vunpack.c.h.b16 %v576
    %v1365 = vunpack.c.l.b16 %v577
    %v1366 = vunpack.c.h.b16 %v577
    %v1367 = vunpack.c.l.b16 %v578
    %v1368 = vunpack.c.h.b16 %v578
    %v1369 = vunpack.c.l.b16 %v579
    %v1370 = vunpack.c.h.b16 %v579
    %v1371 = vunpack.c.l.b16 %v580
    %v1372 = vunpack.c.h.b16 %v580
    %v1373 = vunpack.c.l.b16 %v581
    %v1374 = vunpack.c.h.b16 %v581
    %v1375 = vunpack.c.l.b16 %v582
    %v1376 = vunpack.c.h.b16 %v582
    %v1377 = vunpack.c.l.b16 %v583
    %v1378 = vunpack.c.h.b16 %v583
    %v1379 = vunpack.c.l.b16 %v584
    %v1380 = vunpack.c.h.b16 %v584
    %v1381 = vunpack.c.l.b16 %v585
    %v1382 = vunpack.c.h.b16 %v585
    %v1383 = vunpack.c.l.b16 %v586
    %v1384 = vunpack.c.h.b16 %v586
    %v1385 = vunpack.c.l.b16 %v587
    %v1386 = vunpack.c.h.b16 %v587
    %v1387 = vunpack.c.l.b16 %v588
    %v1388 = vunpack.c.h.b16 %v588
    %v1389 = vunpack.c.l.b16 %v589
    %v1390 = vunpack.c.h.b16 %v589
    %v1391 = vunpack.c.l.b16 %v590
    %v1392 = vunpack.c.h.b16 %v590
    %v1393 = vunpack.c.l.b16 %v591
    %v1394 = vunpack.c.h.b16 %v591
    %v1395 = vunpack.c.l.b16 %v592
    %v1396 = vunpack.c.h.b16 %v592
    %v1397 = vunpack.c.l.b16 %v593
    %v1398 = vunpack.c.h.b16 %v593
    %v1399 = vunpack.c.l.b16 %v594
    %v1400 = vunpack.c.h.b16 %v594
    %v1401 = vunpack.c.l.b16 %v595
    %v1402 = vunpack.c.h.b16 %v595
    %v1403 = vunpack.c.l.b16 %v596
    %v1404 = vunpack.c.h.b16 %v596
    %v1405 = vunpack.c.l.b16 %v597
    %v1406 = vunpack.c.h.b16 %v597
    %v1407 = vunpack.c.l.b16 %v598
    %v1408 = vunpack.c.h.b16 %v598
    %v1409 = vunpack.c.l.b16 %v599
    %v1410 = vunpack.c.h.b16 %v599
    %v1411 = vunpack.c.l.b16 %v600
    %v1412 = vunpack.c.h.b16 %v600
    %v1413 = vunpack.c.l.b16 %v601
    %v1414 = vunpack.c.h.b16 %v601
    %v1415 = vunpack.c.l.b16 %v602
    %v1416 = vunpack.c.h.b16 %v602
    %v1417 = vunpack.c.l.b16 %v603
    %v1418 = vunpack.c.h.b16 %v603
    %v1419 = vunpack.c.l.b16 %v604
    %v1420 = vunpack.c.h.b16 %v604
    %v1421 = vunpack.c.l.b16 %v605
    %v1422 = vunpack.c.h.b16 %v605
    %v1423 = vunpack.c.l.b16 %v606
    %v1424 = vunpack.c.h.b16 %v606
    %v1425 = vunpack.c.l.b16 %v607
    %v1426 = vunpack.c.h.b16 %v607
    %v1427 = vunpack.c.l.b16 %v608
    %v1428 = vunpack.c.h.b16 %v608
    %v1429 = vunpack.c.l.b16 %v609
    %v1430 = vunpack.c.h.b16 %v609
    %v1431 = vunpack.c.l.b16 %v610
    %v1432 = vunpack.c.h.b16 %v610
    %v1433 = vunpack.c.l.b16 %v611
    %v1434 = vunpack.c.h.b16 %v611
    %v1435 = vunpack.c.l.b16 %v612
    %v1436 = vunpack.c.h.b16 %v612
    %v1437 = vunpack.c.l.b16 %v613
    %v1438 = vunpack.c.h.b16 %v613
    %v1439 = vunpack.c.l.b16 %v614
    %v1440 = vunpack.c.h.b16 %v614
    %v1441 = vunpack.c.l.b16 %v615
    %v1442 = vunpack.c.h.b16 %v615
    %v1443 = vunpack.c.l.b16 %v616
    %v1444 = vunpack.c.h.b16 %v616
    %v1445 = vunpack.c.l.b16 %v617
    %v1446 = vunpack.c.h.b16 %v617
    %v1447 = vunpack.c.l.b16 %v618
    %v1448 = vunpack.c.h.b16 %v618
    %v1449 = vunpack.c.l.b16 %v619
    %v1450 = vunpack.c.h.b16 %v619
    %v1451 = vunpack.c.l.b16 %v620
    %v1452 = vunpack.c.h.b16 %v620
    %v1453 = vunpack.c.l.b16 %v621
    %v1454 = vunpack.c.h.b16 %v621
    %v1455 = vunpack.c.l.b16 %v622
    %v1456 = vunpack.c.h.b16 %v622
    %v1457 = vunpack.c.l.b16 %v623
    %v1458 = vunpack.c.h.b16 %v623
    %v1459 = vunpack.c.l.b16 %v624
    %v1460 = vunpack.c.h.b16 %v624
    %v1461 = vunpack.c.l.b16 %v625
    %v1462 = vunpack.c.h.b16 %v625
    %v1463 = vunpack.c.l.b16 %v626
    %v1464 = vunpack.c.h.b16 %v626
    %v1465 = vunpack.c.l.b16 %v627
    %v1466 = vunpack.c.h.b16 %v627
    %v1467 = vunpack.c.l.b16 %v628
    %v1468 = vunpack.c.h.b16 %v628
    %v1469 = vunpack.c.l.b16 %v629
    %v1470 = vunpack.c.h.b16 %v629
    %v1471 = vunpack.c.l.b16 %v630
    %v1472 = vunpack.c.h.b16 %v630
    %v1473 = vunpack.c.l.b16 %v631
    %v1474 = vunpack.c.h.b16 %v631
    %v1475 = vunpack.c.l.b16 %v632
    %v1476 = vunpack.c.h.b16 %v632
    %v1477 = vunpack.c.l.b16 %v633
    %v1478 = vunpack.c.h.b16 %v633
    %v1479 = vunpack.c.l.b16 %v634
    %v1480 = vunpack.c.h.b16 %v634
    %v1481 = vunpack.c.l.b16 %v635
    %v1482 = vunpack.c.h.b16 %v635
    %v1483 = vunpack.c.l.b16 %v636
    %v1484 = vunpack.c.h.b16 %v636
    %v1485 = vunpack.c.l.b16 %v637
    %v1486 = vunpack.c.h.b16 %v637
    %v1487 = vunpack.c.l.b16 %v638
    %v1488 = vunpack.c.h.b16 %v638
    %v1489 = vunpack.c.l.b16 %v639
    %v1490 = vunpack.c.h.b16 %v639
    %v1491 = vunpack.c.l.b16 %v640
    %v1492 = vunpack.c.h.b16 %v640
    %v1493 = vunpack.c.l.b16 %v641
    %v1494 = vunpack.c.h.b16 %v641
    %v1495 = vunpack.c.l.b16 %v642
    %v1496 = vunpack.c.h.b16 %v642
    %v1497 = vunpack.c.l.b16 %v643
    %v1498 = vunpack.c.h.b16 %v643
    %v1499 = vunpack.c.l.b16 %v644
    %v1500 = vunpack.c.h.b16 %v644
    %v1501 = vunpack.c.l.b16 %v645
    %v1502 = vunpack.c.h.b16 %v645
    %v1503 = vunpack.c.l.b16 %v646
    %v1504 = vunpack.c.h.b16 %v646
    %v1505 = vunpack.c.l.b16 %v647
    %v1506 = vunpack.c.h.b16 %v647
    %v1507 = vunpack.c.l.b16 %v648
    %v1508 = vunpack.c.h.b16 %v648
    %v1509 = vunpack.c.l.b16 %v649
    %v1510 = vunpack.c.h.b16 %v649
    %v1511 = vunpack.c.l.b16 %v650
    %v1512 = vunpack.c.h.b16 %v650
    %v1513 = vunpack.c.l.b16 %v651
    %v1514 = vunpack.c.h.b16 %v651
    %v1515 = vunpack.c.l.b16 %v652
    %v1516 = vunpack.c.h.b16 %v652
    %v1517 = vunpack.c.l.b16 %v653
    %v1518 = vunpack.c.h.b16 %v653
    %v1519 = vunpack.c.l.b16 %v654
    %v1520 = vunpack.c.h.b16 %v654
    %v1521 = vunpack.c.l.b16 %v655
    %v1522 = vunpack.c.h.b16 %v655
    %v1523 = vunpack.c.l.b16 %v656
    %v1524 = vunpack.c.h.b16 %v656
    %v1525 = vunpack.c.l.b16 %v657
    %v1526 = vunpack.c.h.b16 %v657
    %v1527 = vunpack.c.l.b16 %v658
    %v1528 = vunpack.c.h.b16 %v658
    %v1529 = vunpack.c.l.b16 %v659
    %v1530 = vunpack.c.h.b16 %v659
    %v1531 = vunpack.c.l.b16 %v660
    %v1532 = vunpack.c.h.b16 %v660
    %v1533 = vunpack.c.l.b16 %v661
    %v1534 = vunpack.c.h.b16 %v661
    %v1535 = vunpack.c.l.b16 %v662
    %v1536 = vunpack.c.h.b16 %v662
    %v1537 = vunpack.c.l.b16 %v663
    %v1538 = vunpack.c.h.b16 %v663
    %v1539 = vunpack.c.l.b16 %v664
    %v1540 = vunpack.c.h.b16 %v664
    %v1541 = vunpack.c.l.b16 %v665
    %v1542 = vunpack.c.h.b16 %v665
    %v1543 = vunpack.c.l.b16 %v666
    %v1544 = vunpack.c.h.b16 %v666
    %v1545 = vunpack.c.l.b16 %v667
    %v1546 = vunpack.c.h.b16 %v667
    %v1547 = vunpack.c.l.b16 %v668
    %v1548 = vunpack.c.h.b16 %v668
    %v1549 = vunpack.c.l.b16 %v669
    %v1550 = vunpack.c.h.b16 %v669
    %v1551 = vunpack.c.l.b16 %v670
    %v1552 = vunpack.c.h.b16 %v670
    %v1553 = vunpack.c.l.b16 %v671
    %v1554 = vunpack.c.h.b16 %v671
    %v1555 = vunpack.c.l.b16 %v672
    %v1556 = vunpack.c.h.b16 %v672
    %v1557 = vunpack.c.l.b16 %v673
    %v1558 = vunpack.c.h.b16 %v673
    %v1559 = vunpack.c.l.b16 %v674
    %v1560 = vunpack.c.h.b16 %v674
    %v1561 = vunpack.c.l.b16 %v675
    %v1562 = vunpack.c.h.b16 %v675
    %v1563 = vunpack.c.l.b16 %v676
    %v1564 = vunpack.c.h.b16 %v676
    %v1565 = vunpack.c.l.b16 %v677
    %v1566 = vunpack.c.h.b16 %v677
    %v1567 = vunpack.c.l.b16 %v678
    %v1568 = vunpack.c.h.b16 %v678
    %v1569 = vunpack.c.l.b16 %v679
    %v1570 = vunpack.c.h.b16 %v679
    %v1571 = vunpack.c.l.b16 %v680
    %v1572 = vunpack.c.h.b16 %v680
    %v1573 = vunpack.c.l.b16 %v681
    %v1574 = vunpack.c.h.b16 %v681
    %v1575 = vunpack.c.l.b16 %v682
    %v1576 = vunpack.c.h.b16 %v682
    %v1577 = vunpack.c.l.b16 %v683
    %v1578 = vunpack.c.h.b16 %v683
    %v1579 = vunpack.c.l.b16 %v684
    %v1580 = vunpack.c.h.b16 %v684
    %v1581 = vpack.c.b16 %v1011, %v1005
    %v1582 = vpack.c.b16 %v1012, %v1006
    %v1583 = vpack.c.b16 %v1013, %v1007
    %v1584 = vpack.c.b16 %v1014, %v1008
    %v1585 = vpack.c.b16 %v1015, %v1009
    %v1586 = vpack.c.b16 %v1016, %v1010
    %v1587 = vpack.c.b16 %v1023, %v1017
    %v1588 = vpack.c.b16 %v1024, %v1018
    %v1589 = vpack.c.b16 %v1025, %v1019
    %v1590 = vpack.c.b16 %v1026, %v1020
    %v1591 = vpack.c.b16 %v1027, %v1021
    %v1592 = vpack.c.b16 %v1028, %v1022
    %v1593 = vpack.c.b16 %v1035, %v1029
    %v1594 = vpack.c.b16 %v1036, %v1030
    %v1595 = vpack.c.b16 %v1037, %v1031
    %v1596 = vpack.c.b16 %v1038, %v1032
    %v1597 = vpack.c.b16 %v1039, %v1033
    %v1598 = vpack.c.b16 %v1040, %v1034
    %v1599 = vpack.c.b16 %v1047, %v1041
    %v1600 = vpack.c.b16 %v1048, %v1042
    %v1601 = vpack.c.b16 %v1049, %v1043
    %v1602 = vpack.c.b16 %v1050, %v1044
    %v1603 = vpack.c.b16 %v1051, %v1045
    %v1604 = vpack.c.b16 %v1052, %v1046
    %v1605 = vpack.c.b16 %v1059, %v1053
    %v1606 = vpack.c.b16 %v1060, %v1054
    %v1607 = vpack.c.b16 %v1061, %v1055
    %v1608 = vpack.c.b16 %v1062, %v1056
    %v1609 = vpack.c.b16 %v1063, %v1057
    %v1610 = vpack.c.b16 %v1064, %v1058
    %v1611 = vpack.c.b16 %v1071, %v1065
    %v1612 = vpack.c.b16 %v1072, %v1066
    %v1613 = vpack.c.b16 %v1073, %v1067
    %v1614 = vpack.c.b16 %v1074, %v1068
    %v1615 = vpack.c.b16 %v1075, %v1069
    %v1616 = vpack.c.b16 %v1076, %v1070
    %v1617 = vpack.c.b16 %v1083, %v1077
    %v1618 = vpack.c.b16 %v1084, %v1078
    %v1619 = vpack.c.b16 %v1085, %v1079
    %v1620 = vpack.c.b16 %v1086, %v1080
    %v1621 = vpack.c.b16 %v1087, %v1081
    %v1622 = vpack.c.b16 %v1088, %v1082
    %v1623 = vpack.c.b16 %v1095, %v1089
    %v1624 = vpack.c.b16 %v1096, %v1090
    %v1625 = vpack.c.b16 %v1097, %v1091
    %v1626 = vpack.c.b16 %v1098, %v1092
    %v1627 = vpack.c.b16 %v1099, %v1093
    %v1628 = vpack.c.b16 %v1100, %v1094
    %v1629 = vpack.c.b16 %v1107, %v1101
    %v1630 = vpack.c.b16 %v1108, %v1102
    %v1631 = vpack.c.b16 %v1109, %v1103
    %v1632 = vpack.c.b16 %v1110, %v1104
    %v1633 = vpack.c.b16 %v1111, %v1105
    %v1634 = vpack.c.b16 %v1112, %v1106
    %v1635 = vpack.c.b16 %v1119, %v1113
    %v1636 = vpack.c.b16 %v1120, %v1114
    %v1637 = vpack.c.b16 %v1121, %v1115
    %v1638 = vpack.c.b16 %v1122, %v1116
    %v1639 = vpack.c.b16 %v1123, %v1117
    %v1640 = vpack.c.b16 %v1124, %v1118
    %v1641 = vpack.c.b16 %v1131, %v1125
    %v1642 = vpack.c.b16 %v1132, %v1126
    %v1643 = vpack.c.b16 %v1133, %v1127
    %v1644 = vpack.c.b16 %v1134, %v1128
    %v1645 = vpack.c.b16 %v1135, %v1129
    %v1646 = vpack.c.b16 %v1136, %v1130
    %v1647 = vpack.c.b16 %v1143, %v1137
    %v1648 = vpack.c.b16 %v1144, %v1138
    %v1649 = vpack.c.b16 %v1145, %v1139
    %v1650 = vpack.c.b16 %v1146, %v1140
    %v1651 = vpack.c.b16 %v1147, %v1141
    %v1652 = vpack.c.b16 %v1148, %v1142
    %v1653 = vpack.c.b16 %v1155, %v1149
    %v1654 = vpack.c.b16 %v1156, %v1150
    %v1655 = vpack.c.b16 %v1157, %v1151
    %v1656 = vpack.c.b16 %v1158, %v1152
    %v1657 = vpack.c.b16 %v1159, %v1153
    %v1658 = vpack.c.b16 %v1160, %v1154
    %v1659 = vpack.c.b16 %v1167, %v1161
    %v1660 = vpack.c.b16 %v1168, %v1162
    %v1661 = vpack.c.b16 %v1169, %v1163
    %v1662 = vpack.c.b16 %v1170, %v1164
    %v1663 = vpack.c.b16 %v1171, %v1165
    %v1664 = vpack.c.b16 %v1172, %v1166
    %v1665 = vpack.c.b16 %v1179, %v1173
    %v1666 = vpack.c.b16 %v1180, %v1174
    %v1667 = vpack.c.b16 %v1181, %v1175
    %v1668 = vpack.c.b16 %v1182, %v1176
    %v1669 = vpack.c.b16 %v1183, %v1177
    %v1670 = vpack.c.b16 %v1184, %v1178
    %v1671 = vpack.c.b16 %v1191, %v1185
    %v1672 = vpack.c.b16 %v1192, %v1186
    %v1673 = vpack.c.b16 %v1193, %v1187
    %v1674 = vpack.c.b16 %v1194, %v1188
    %v1675 = vpack.c.b16 %v1195, %v1189
    %v1676 = vpack.c.b16 %v1196, %v1190
    %v1677 = vpack.c.b16 %v1203, %v1197
    %v1678 = vpack.c.b16 %v1204, %v1198
    %v1679 = vpack.c.b16 %v1205, %v1199
    %v1680 = vpack.c.b16 %v1206, %v1200
    %v1681 = vpack.c.b16 %v1207, %v1201
    %v1682 = vpack.c.b16 %v1208, %v1202
    %v1683 = vpack.c.b16 %v1215, %v1209
    %v1684 = vpack.c.b16 %v1216, %v1210
    %v1685 = vpack.c.b16 %v1217, %v1211
    %v1686 = vpack.c.b16 %v1218, %v1212
    %v1687 = vpack.c.b16 %v1219, %v1213
    %v1688 = vpack.c.b16 %v1220, %v1214
    %v1689 = vpack.c.b16 %v1227, %v1221
    %v1690 = vpack.c.b16 %v1228, %v1222
    %v1691 = vpack.c.b16 %v1229, %v1223
    %v1692 = vpack.c.b16 %v1230, %v1224
    %v1693 = vpack.c.b16 %v1231, %v1225
    %v1694 = vpack.c.b16 %v1232, %v1226
    %v1695 = vpack.c.b16 %v1239, %v1233
    %v1696 = vpack.c.b16 %v1240, %v1234
    %v1697 = vpack.c.b16 %v1241, %v1235
    %v1698 = vpack.c.b16 %v1242, %v1236
    %v1699 = vpack.c.b16 %v1243, %v1237
    %v1700 = vpack.c.b16 %v1244, %v1238
    %v1701 = vpack.c.b16 %v1251, %v1245
    %v1702 = vpack.c.b16 %v1252, %v1246
    %v1703 = vpack.c.b16 %v1253, %v1247
    %v1704 = vpack.c.b16 %v1254, %v1248
    %v1705 = vpack.c.b16 %v1255, %v1249
    %v1706 = vpack.c.b16 %v1256, %v1250
    %v1707 = vpack.c.b16 %v1263, %v1257
    %v1708 = vpack.c.b16 %v1264, %v1258
    %v1709 = vpack.c.b16 %v1265, %v1259
    %v1710 = vpack.c.b16 %v1266, %v1260
    %v1711 = vpack.c.b16 %v1267, %v1261
    %v1712 = vpack.c.b16 %v1268, %v1262
    %v1713 = vpack.c.b16 %v1275, %v1269
    %v1714 = vpack.c.b16 %v1276, %v1270
    %v1715 = vpack.c.b16 %v1277, %v1271
    %v1716 = vpack.c.b16 %v1278, %v1272
    %v1717 = vpack.c.b16 %v1279, %v1273
    %v1718 = vpack.c.b16 %v1280, %v1274
    %v1719 = vpack.c.b16 %v1287, %v1281
    %v1720 = vpack.c.b16 %v1288, %v1282
    %v1721 = vpack.c.b16 %v1289, %v1283
    %v1722 = vpack.c.b16 %v1290, %v1284
    %v1723 = vpack.c.b16 %v1291, %v1285
    %v1724 = vpack.c.b16 %v1292, %v1286
    %v1725 = vpack.c.b16 %v1299, %v1293
    %v1726 = vpack.c.b16 %v1300, %v1294
    %v1727 = vpack.c.b16 %v1301, %v1295
    %v1728 = vpack.c.b16 %v1302, %v1296
    %v1729 = vpack.c.b16 %v1303, %v1297
    %v1730 = vpack.c.b16 %v1304, %v1298
    %v1731 = vpack.c.b16 %v1311, %v1305
    %v1732 = vpack.c.b16 %v1312, %v1306
    %v1733 = vpack.c.b16 %v1313, %v1307
    %v1734 = vpack.c.b16 %v1314, %v1308
    %v1735 = vpack.c.b16 %v1315, %v1309
    %v1736 = vpack.c.b16 %v1316, %v1310
    %v1737 = vpack.c.b16 %v1323, %v1317
    %v1738 = vpack.c.b16 %v1324, %v1318
    %v1739 = vpack.c.b16 %v1325, %v1319
    %v1740 = vpack.c.b16 %v1326, %v1320
    %v1741 = vpack.c.b16 %v1327, %v1321
    %v1742 = vpack.c.b16 %v1328, %v1322
    %v1743 = vpack.c.b16 %v1335, %v1329
    %v1744 = vpack.c.b16 %v1336, %v1330
    %v1745 = vpack.c.b16 %v1337, %v1331
    %v1746 = vpack.c.b16 %v1338, %v1332
    %v1747 = vpack.c.b16 %v1339, %v1333
    %v1748 = vpack.c.b16 %v1340, %v1334
    %v1749 = vpack.c.b16 %v1347, %v1341
    %v1750 = vpack.c.b16 %v1348, %v1342
    %v1751 = vpack.c.b16 %v1349, %v1343
    %v1752 = vpack.c.b16 %v1350, %v1344
    %v1753 = vpack.c.b16 %v1351, %v1345
    %v1754 = vpack.c.b16 %v1352, %v1346
    %v1755 = vpack.c.b16 %v1359, %v1353
    %v1756 = vpack.c.b16 %v1360, %v1354
    %v1757 = vpack.c.b16 %v1361, %v1355
    %v1758 = vpack.c.b16 %v1362, %v1356
    %v1759 = vpack.c.b16 %v1363, %v1357
    %v1760 = vpack.c.b16 %v1364, %v1358
    %v1761 = vpack.c.b16 %v1371, %v1365
    %v1762 = vpack.c.b16 %v1372, %v1366
    %v1763 = vpack.c.b16 %v1373, %v1367
    %v1764 = vpack.c.b16 %v1374, %v1368
    %v1765 = vpack.c.b16 %v1375, %v1369
    %v1766 = vpack.c.b16 %v1376, %v1370
    %v1767 = vpack.c.b16 %v1383, %v1377
    %v1768 = vpack.c.b16 %v1384, %v1378
    %v1769 = vpack.c.b16 %v1385, %v1379
    %v1770 = vpack.c.b16 %v1386, %v1380
    %v1771 = vpack.c.b16 %v1387, %v1381
    %v1772 = vpack.c.b16 %v1388, %v1382
    %v1773 = vpack.c.b16 %v1395, %v1389
    %v1774 = vpack.c.b16 %v1396, %v1390
    %v1775 = vpack.c.b16 %v1397, %v1391
    %v1776 = vpack.c.b16 %v1398, %v1392
    %v1777 = vpack.c.b16 %v1399, %v1393
    %v1778 = vpack.c.b16 %v1400, %v1394
    %v1779 = vpack.c.b16 %v1407, %v1401
    %v1780 = vpack.c.b16 %v1408, %v1402
    %v1781 = vpack.c.b16 %v1409, %v1403
    %v1782 = vpack.c.b16 %v1410, %v1404
    %v1783 = vpack.c.b16 %v1411, %v1405
    %v1784 = vpack.c.b16 %v1412, %v1406
    %v1785 = vpack.c.b16 %v1419, %v1413
    %v1786 = vpack.c.b16 %v1420, %v1414
    %v1787 = vpack.c.b16 %v1421, %v1415
    %v1788 = vpack.c.b16 %v1422, %v1416
    %v1789 = vpack.c.b16 %v1423, %v1417
    %v1790 = vpack.c.b16 %v1424, %v1418
    %v1791 = vpack.c.b16 %v1431, %v1425
    %v1792 = vpack.c.b16 %v1432, %v1426
    %v1793 = vpack.c.b16 %v1433, %v1427
    %v1794 = vpack.c.b16 %v1434, %v1428
    %v1795 = vpack.c.b16 %v1435, %v1429
    %v1796 = vpack.c.b16 %v1436, %v1430
    %v1797 = vpack.c.b16 %v1443, %v1437
    %v1798 = vpack.c.b16 %v1444, %v1438
    %v1799 = vpack.c.b16 %v1445, %v1439
    %v1800 = vpack.c.b16 %v1446, %v1440
    %v1801 = vpack.c.b16 %v1447, %v1441
    %v1802 = vpack.c.b16 %v1448, %v1442
    %v1803 = vpack.c.b16 %v1455, %v1449
    %v1804 = vpack.c.b16 %v1456, %v1450
    %v1805 = vpack.c.b16 %v1457, %v1451
    %v1806 = vpack.c.b16 %v1458, %v1452
    %v1807 = vpack.c.b16 %v1459, %v1453
    %v1808 = vpack.c.b16 %v1460, %v1454
    %v1809 = vpack.c.b16 %v1467, %v1461
    %v1810 = vpack.c.b16 %v1468, %v1462
    %v1811 = vpack.c.b16 %v1469, %v1463
    %v1812 = vpack.c.b16 %v1470, %v1464
    %v1813 = vpack.c.b16 %v1471, %v1465
    %v1814 = vpack.c.b16 %v1472, %v1466
    %v1815 = vpack.c.b16 %v1479, %v1473
    %v1816 = vpack.c.b16 %v1480, %v1474
    %v1817 = vpack.c.b16 %v1481, %v1475
    %v1818 = vpack.c.b16 %v1482, %v1476
    %v1819 = vpack.c.b16 %v1483, %v1477
    %v1820 = vpack.c.b16 %v1484, %v1478
    %v1821 = vpack.c.b16 %v1491, %v1485
    %v1822 = vpack.c.b16 %v1492, %v1486
    %v1823 = vpack.c.b16 %v1493, %v1487
    %v1824 = vpack.c.b16 %v1494, %v1488
    %v1825 = vpack.c.b16 %v1495, %v1489
    %v1826 = vpack.c.b16 %v1496, %v1490
    %v1827 = vpack.c.b16 %v1503, %v1497
    %v1828 = vpack.c.b16 %v1504, %v1498
    %v1829 = vpack.c.b16 %v1505, %v1499
    %v1830 = vpack.c.b16 %v1506, %v1500
    %v1831 = vpack.c.b16 %v1507, %v1501
    %v1832 = vpack.c.b16 %v1508, %v1502
    %v1833 = vpack.c.b16 %v1515, %v1509
    %v1834 = vpack.c.b16 %v1516, %v1510
    %v1835 = vpack.c.b16 %v1517, %v1511
    %v1836 = vpack.c.b16 %v1518, %v1512
    %v1837 = vpack.c.b16 %v1519, %v1513
    %v1838 = vpack.c.b16 %v1520, %v1514
    %v1839 = vpack.c.b16 %v1527, %v1521
    %v1840 = vpack.c.b16 %v1528, %v1522
    %v1841 = vpack.c.b16 %v1529, %v1523
    %v1842 = vpack.c.b16 %v1530, %v1524
    %v1843 = vpack.c.b16 %v1531, %v1525
    %v1844 = vpack.c.b16 %v1532, %v1526
    %v1845 = vpack.c.b16 %v1539, %v1533
    %v1846 = vpack.c.b16 %v1540, %v1534
    %v1847 = vpack.c.b16 %v1541, %v1535
    %v1848 = vpack.c.b16 %v1542, %v1536
    %v1849 = vpack.c.b16 %v1543, %v1537
    %v1850 = vpack.c.b16 %v1544, %v1538
    %v1851 = vpack.c.b16 %v1551, %v1545
    %v1852 = vpack.c.b16 %v1552, %v1546
    %v1853 = vpack.c.b16 %v1553, %v1547
    %v1854 = vpack.c.b16 %v1554, %v1548
    %v1855 = vpack.c.b16 %v1555, %v1549
    %v1856 = vpack.c.b16 %v1556, %v1550
    %v1857 = vpack.c.b16 %v1563, %v1557
    %v1858 = vpack.c.b16 %v1564, %v1558
    %v1859 = vpack.c.b16 %v1565, %v1559
    %v1860 = vpack.c.b16 %v1566, %v1560
    %v1861 = vpack.c.b16 %v1567, %v1561
    %v1862 = vpack.c.b16 %v1568, %v1562
    %v1863 = vpack.c.b16 %v1575, %v1569
    %v1864 = vpack.c.b16 %v1576, %v1570
    %v1865 = vpack.c.b16 %v1577, %v1571
    %v1866 = vpack.c.b16 %v1578, %v1572
    %v1867 = vpack.c.b16 %v1579, %v1573
    %v1868 = vpack.c.b16 %v1580, %v1574
    %2157 = vmatprep.subr.bf16.mxu0 %v1582
    %2158 = vmatpush1.bf16.msra.mxu0 %v1581
    %2159 = vmatprep.subr.bf16.mxu0 %v1588
    %2160 = vmatpush1.bf16.msra.mxu0 %v1587
    %2161 = vmatprep.subr.bf16.mxu0 %v1594
    %2162 = vmatpush1.bf16.msra.mxu0 %v1593
    %2163 = vmatprep.subr.bf16.mxu0 %v1600
    %2164 = vmatpush1.bf16.msra.mxu0 %v1599
    %2165 = vmatprep.subr.bf16.mxu0 %v1606
    %2166 = vmatpush1.bf16.msra.mxu0 %v1605
    %2167 = vmatprep.subr.bf16.mxu0 %v1612
    %2168 = vmatpush1.bf16.msra.mxu0 %v1611
    %2169 = vmatprep.subr.bf16.mxu0 %v1618
    %2170 = vmatpush1.bf16.msra.mxu0 %v1617
    %2171 = vmatprep.subr.bf16.mxu0 %v1624
    %2172 = vmatpush1.bf16.msra.mxu0 %v1623
    %2173 = vmatprep.subr.bf16.mxu0 %v1630
    %2174 = vmatpush1.bf16.msra.mxu0 %v1629
    %2175 = vmatprep.subr.bf16.mxu0 %v1636
    %2176 = vmatpush1.bf16.msra.mxu0 %v1635
    %2177 = vmatprep.subr.bf16.mxu0 %v1642
    %2178 = vmatpush1.bf16.msra.mxu0 %v1641
    %2179 = vmatprep.subr.bf16.mxu0 %v1648
    %2180 = vmatpush1.bf16.msra.mxu0 %v1647
    %2181 = vmatprep.subr.bf16.mxu0 %v1654
    %2182 = vmatpush1.bf16.msra.mxu0 %v1653
    %2183 = vmatprep.subr.bf16.mxu0 %v1660
    %2184 = vmatpush1.bf16.msra.mxu0 %v1659
    %2185 = vmatprep.subr.bf16.mxu0 %v1666
    %2186 = vmatpush1.bf16.msra.mxu0 %v1665
    %2187 = vmatprep.subr.bf16.mxu0 %v1672
    %2188 = vmatpush1.bf16.msra.mxu0 %v1671
    %2189 = vmatprep.mubr.bf16.mxu0 %v392
    %2190 = vmatmul.mubr.bf16.gmra.mrb[0].mxu0 %v391
    %v2191 = vpop.f32.mrb[0].mxu0
    %v2192 = vadd.f32 %v690, %v2191
    %v2193 = vpop.f32.mrb[0].mxu0
    %v2194 = vadd.f32 %v694, %v2193
    %v2195 = vpop.f32.mrb[0].mxu0
    %v2196 = vpop.f32.mrb[0].mxu0
    %2197 = vdwg.mxu0
    %2198 = vmatprep.subr.bf16.mxu0 %v1678
    %2199 = vmatpush1.bf16.msra.mxu0 %v1677
    %2200 = vmatprep.subr.bf16.mxu0 %v1684
    %2201 = vmatpush1.bf16.msra.mxu0 %v1683
    %2202 = vmatprep.subr.bf16.mxu0 %v1690
    %2203 = vmatpush1.bf16.msra.mxu0 %v1689
    %2204 = vmatprep.subr.bf16.mxu0 %v1696
    %2205 = vmatpush1.bf16.msra.mxu0 %v1695
    %2206 = vmatprep.subr.bf16.mxu0 %v1702
    %2207 = vmatpush1.bf16.msra.mxu0 %v1701
    %2208 = vmatprep.subr.bf16.mxu0 %v1708
    %2209 = vmatpush1.bf16.msra.mxu0 %v1707
    %2210 = vmatprep.subr.bf16.mxu0 %v1714
    %2211 = vmatpush1.bf16.msra.mxu0 %v1713
    %2212 = vmatprep.subr.bf16.mxu0 %v1720
    %2213 = vmatpush1.bf16.msra.mxu0 %v1719
    %2214 = vmatprep.subr.bf16.mxu0 %v1726
    %2215 = vmatpush1.bf16.msra.mxu0 %v1725
    %2216 = vmatprep.subr.bf16.mxu0 %v1732
    %2217 = vmatpush1.bf16.msra.mxu0 %v1731
    %2218 = vmatprep.subr.bf16.mxu0 %v1738
    %2219 = vmatpush1.bf16.msra.mxu0 %v1737
    %2220 = vmatprep.subr.bf16.mxu0 %v1744
    %2221 = vmatpush1.bf16.msra.mxu0 %v1743
    %2222 = vmatprep.subr.bf16.mxu0 %v1750
    %2223 = vmatpush1.bf16.msra.mxu0 %v1749
    %2224 = vmatprep.subr.bf16.mxu0 %v1756
    %2225 = vmatpush1.bf16.msra.mxu0 %v1755
    %2226 = vmatprep.subr.bf16.mxu0 %v1762
    %2227 = vmatpush1.bf16.msra.mxu0 %v1761
    %2228 = vmatprep.subr.bf16.mxu0 %v1768
    %2229 = vmatpush1.bf16.msra.mxu0 %v1767
    %2230 = vmatprep.mubr.bf16.mxu0 %v394
    %2231 = vmatmul.mubr.bf16.gmra.mrb[0].mxu0 %v393
    %v2232 = vpop.f32.mrb[0].mxu0
    %v2233 = vadd.f32 %v2192, %v2232
    %v2234 = vpop.f32.mrb[0].mxu0
    %v2235 = vadd.f32 %v2194, %v2234
    %v2236 = vpop.f32.mrb[0].mxu0
    %v2237 = vpop.f32.mrb[0].mxu0
    %2238 = vdwg.mxu0
    %2239 = vmatprep.subr.bf16.mxu0 %v1774
    %2240 = vmatpush1.bf16.msra.mxu0 %v1773
    %2241 = vmatprep.subr.bf16.mxu0 %v1780
    %2242 = vmatpush1.bf16.msra.mxu0 %v1779
    %2243 = vmatprep.subr.bf16.mxu0 %v1786
    %2244 = vmatpush1.bf16.msra.mxu0 %v1785
    %2245 = vmatprep.subr.bf16.mxu0 %v1792
    %2246 = vmatpush1.bf16.msra.mxu0 %v1791
    %2247 = vmatprep.subr.bf16.mxu0 %v1798
    %2248 = vmatpush1.bf16.msra.mxu0 %v1797
    %2249 = vmatprep.subr.bf16.mxu0 %v1804
    %2250 = vmatpush1.bf16.msra.mxu0 %v1803
    %2251 = vmatprep.subr.bf16.mxu0 %v1810
    %2252 = vmatpush1.bf16.msra.mxu0 %v1809
    %2253 = vmatprep.subr.bf16.mxu0 %v1816
    %2254 = vmatpush1.bf16.msra.mxu0 %v1815
    %2255 = vmatprep.subr.bf16.mxu0 %v1822
    %2256 = vmatpush1.bf16.msra.mxu0 %v1821
    %2257 = vmatprep.subr.bf16.mxu0 %v1828
    %2258 = vmatpush1.bf16.msra.mxu0 %v1827
    %2259 = vmatprep.subr.bf16.mxu0 %v1834
    %2260 = vmatpush1.bf16.msra.mxu0 %v1833
    %2261 = vmatprep.subr.bf16.mxu0 %v1840
    %2262 = vmatpush1.bf16.msra.mxu0 %v1839
    %2263 = vmatprep.subr.bf16.mxu0 %v1846
    %2264 = vmatpush1.bf16.msra.mxu0 %v1845
    %2265 = vmatprep.subr.bf16.mxu0 %v1852
    %2266 = vmatpush1.bf16.msra.mxu0 %v1851
    %2267 = vmatprep.subr.bf16.mxu0 %v1858
    %2268 = vmatpush1.bf16.msra.mxu0 %v1857
    %2269 = vmatprep.subr.bf16.mxu0 %v1864
    %2270 = vmatpush1.bf16.msra.mxu0 %v1863
    %2271 = vmatprep.mubr.bf16.mxu0 %v396
    %2272 = vmatmul.mubr.bf16.gmra.mrb[0].mxu0 %v395
    %v2273 = vpop.f32.mrb[0].mxu0
    %v2274 = vadd.f32 %v2233, %v2273
    %v2275 = vpop.f32.mrb[0].mxu0
    %v2276 = vadd.f32 %v2235, %v2275
    %v2277 = vpop.f32.mrb[0].mxu0
    %v2278 = vpop.f32.mrb[0].mxu0
    %2279 = vdwg.mxu0
    %2280 = vmatprep.subr.bf16.mxu0 %v1584
    %2281 = vmatpush1.bf16.msra.mxu0 %v1583
    %2282 = vmatprep.subr.bf16.mxu0 %v1590
    %2283 = vmatpush1.bf16.msra.mxu0 %v1589
    %2284 = vmatprep.subr.bf16.mxu0 %v1596
    %2285 = vmatpush1.bf16.msra.mxu0 %v1595
    %2286 = vmatprep.subr.bf16.mxu0 %v1602
    %2287 = vmatpush1.bf16.msra.mxu0 %v1601
    %2288 = vmatprep.subr.bf16.mxu0 %v1608
    %2289 = vmatpush1.bf16.msra.mxu0 %v1607
    %2290 = vmatprep.subr.bf16.mxu0 %v1614
    %2291 = vmatpush1.bf16.msra.mxu0 %v1613
    %2292 = vmatprep.subr.bf16.mxu0 %v1620
    %2293 = vmatpush1.bf16.msra.mxu0 %v1619
    %2294 = vmatprep.subr.bf16.mxu0 %v1626
    %2295 = vmatpush1.bf16.msra.mxu0 %v1625
    %2296 = vmatprep.subr.bf16.mxu0 %v1632
    %2297 = vmatpush1.bf16.msra.mxu0 %v1631
    %2298 = vmatprep.subr.bf16.mxu0 %v1638
    %2299 = vmatpush1.bf16.msra.mxu0 %v1637
    %2300 = vmatprep.subr.bf16.mxu0 %v1644
    %2301 = vmatpush1.bf16.msra.mxu0 %v1643
    %2302 = vmatprep.subr.bf16.mxu0 %v1650
    %2303 = vmatpush1.bf16.msra.mxu0 %v1649
    %2304 = vmatprep.subr.bf16.mxu0 %v1656
    %2305 = vmatpush1.bf16.msra.mxu0 %v1655
    %2306 = vmatprep.subr.bf16.mxu0 %v1662
    %2307 = vmatpush1.bf16.msra.mxu0 %v1661
    %2308 = vmatprep.subr.bf16.mxu0 %v1668
    %2309 = vmatpush1.bf16.msra.mxu0 %v1667
    %2310 = vmatprep.subr.bf16.mxu0 %v1674
    %2311 = vmatpush1.bf16.msra.mxu0 %v1673
    %2312 = vmatprep.mubr.bf16.mxu0 %v392
    %2313 = vmatmul.mubr.bf16.gmra.mrb[0].mxu0 %v391
    %v2314 = vpop.f32.mrb[0].mxu0
    %v2315 = vadd.f32 %v698, %v2314
    %v2316 = vpop.f32.mrb[0].mxu0
    %v2317 = vadd.f32 %v702, %v2316
    %v2318 = vpop.f32.mrb[0].mxu0
    %v2319 = vpop.f32.mrb[0].mxu0
    %2320 = vdwg.mxu0
    %2321 = vmatprep.subr.bf16.mxu0 %v1680
    %2322 = vmatpush1.bf16.msra.mxu0 %v1679
    %2323 = vmatprep.subr.bf16.mxu0 %v1686
    %2324 = vmatpush1.bf16.msra.mxu0 %v1685
    %2325 = vmatprep.subr.bf16.mxu0 %v1692
    %2326 = vmatpush1.bf16.msra.mxu0 %v1691
    %2327 = vmatprep.subr.bf16.mxu0 %v1698
    %2328 = vmatpush1.bf16.msra.mxu0 %v1697
    %2329 = vmatprep.subr.bf16.mxu0 %v1704
    %2330 = vmatpush1.bf16.msra.mxu0 %v1703
    %2331 = vmatprep.subr.bf16.mxu0 %v1710
    %2332 = vmatpush1.bf16.msra.mxu0 %v1709
    %2333 = vmatprep.subr.bf16.mxu0 %v1716
    %2334 = vmatpush1.bf16.msra.mxu0 %v1715
    %2335 = vmatprep.subr.bf16.mxu0 %v1722
    %2336 = vmatpush1.bf16.msra.mxu0 %v1721
    %2337 = vmatprep.subr.bf16.mxu0 %v1728
    %2338 = vmatpush1.bf16.msra.mxu0 %v1727
    %2339 = vmatprep.subr.bf16.mxu0 %v1734
    %2340 = vmatpush1.bf16.msra.mxu0 %v1733
    %2341 = vmatprep.subr.bf16.mxu0 %v1740
    %2342 = vmatpush1.bf16.msra.mxu0 %v1739
    %2343 = vmatprep.subr.bf16.mxu0 %v1746
    %2344 = vmatpush1.bf16.msra.mxu0 %v1745
    %2345 = vmatprep.subr.bf16.mxu0 %v1752
    %2346 = vmatpush1.bf16.msra.mxu0 %v1751
    %2347 = vmatprep.subr.bf16.mxu0 %v1758
    %2348 = vmatpush1.bf16.msra.mxu0 %v1757
    %2349 = vmatprep.subr.bf16.mxu0 %v1764
    %2350 = vmatpush1.bf16.msra.mxu0 %v1763
    %2351 = vmatprep.subr.bf16.mxu0 %v1770
    %2352 = vmatpush1.bf16.msra.mxu0 %v1769
    %2353 = vmatprep.mubr.bf16.mxu0 %v394
    %2354 = vmatmul.mubr.bf16.gmra.mrb[0].mxu0 %v393
    %v2355 = vpop.f32.mrb[0].mxu0
    %v2356 = vadd.f32 %v2315, %v2355
    %v2357 = vpop.f32.mrb[0].mxu0
    %v2358 = vadd.f32 %v2317, %v2357
    %v2359 = vpop.f32.mrb[0].mxu0
    %v2360 = vpop.f32.mrb[0].mxu0
    %2361 = vdwg.mxu0
    %2362 = vmatprep.subr.bf16.mxu0 %v1776
    %2363 = vmatpush1.bf16.msra.mxu0 %v1775
    %2364 = vmatprep.subr.bf16.mxu0 %v1782
    %2365 = vmatpush1.bf16.msra.mxu0 %v1781
    %2366 = vmatprep.subr.bf16.mxu0 %v1788
    %2367 = vmatpush1.bf16.msra.mxu0 %v1787
    %2368 = vmatprep.subr.bf16.mxu0 %v1794
    %2369 = vmatpush1.bf16.msra.mxu0 %v1793
    %2370 = vmatprep.subr.bf16.mxu0 %v1800
    %2371 = vmatpush1.bf16.msra.mxu0 %v1799
    %2372 = vmatprep.subr.bf16.mxu0 %v1806
    %2373 = vmatpush1.bf16.msra.mxu0 %v1805
    %2374 = vmatprep.subr.bf16.mxu0 %v1812
    %2375 = vmatpush1.bf16.msra.mxu0 %v1811
    %2376 = vmatprep.subr.bf16.mxu0 %v1818
    %2377 = vmatpush1.bf16.msra.mxu0 %v1817
    %2378 = vmatprep.subr.bf16.mxu0 %v1824
    %2379 = vmatpush1.bf16.msra.mxu0 %v1823
    %2380 = vmatprep.subr.bf16.mxu0 %v1830
    %2381 = vmatpush1.bf16.msra.mxu0 %v1829
    %2382 = vmatprep.subr.bf16.mxu0 %v1836
    %2383 = vmatpush1.bf16.msra.mxu0 %v1835
    %2384 = vmatprep.subr.bf16.mxu0 %v1842
    %2385 = vmatpush1.bf16.msra.mxu0 %v1841
    %2386 = vmatprep.subr.bf16.mxu0 %v1848
    %2387 = vmatpush1.bf16.msra.mxu0 %v1847
    %2388 = vmatprep.subr.bf16.mxu0 %v1854
    %2389 = vmatpush1.bf16.msra.mxu0 %v1853
    %2390 = vmatprep.subr.bf16.mxu0 %v1860
    %2391 = vmatpush1.bf16.msra.mxu0 %v1859
    %2392 = vmatprep.subr.bf16.mxu0 %v1866
    %2393 = vmatpush1.bf16.msra.mxu0 %v1865
    %2394 = vmatprep.mubr.bf16.mxu0 %v396
    %2395 = vmatmul.mubr.bf16.gmra.mrb[0].mxu0 %v395
    %v2396 = vpop.f32.mrb[0].mxu0
    %v2397 = vadd.f32 %v2356, %v2396
    %v2398 = vpop.f32.mrb[0].mxu0
    %v2399 = vadd.f32 %v2358, %v2398
    %v2400 = vpop.f32.mrb[0].mxu0
    %v2401 = vpop.f32.mrb[0].mxu0
    %2402 = vdwg.mxu0
    %2403 = vmatprep.subr.bf16.mxu0 %v1586
    %2404 = vmatpush1.bf16.msra.mxu0 %v1585
    %2405 = vmatprep.subr.bf16.mxu0 %v1592
    %2406 = vmatpush1.bf16.msra.mxu0 %v1591
    %2407 = vmatprep.subr.bf16.mxu0 %v1598
    %2408 = vmatpush1.bf16.msra.mxu0 %v1597
    %2409 = vmatprep.subr.bf16.mxu0 %v1604
    %2410 = vmatpush1.bf16.msra.mxu0 %v1603
    %2411 = vmatprep.subr.bf16.mxu0 %v1610
    %2412 = vmatpush1.bf16.msra.mxu0 %v1609
    %2413 = vmatprep.subr.bf16.mxu0 %v1616
    %2414 = vmatpush1.bf16.msra.mxu0 %v1615
    %2415 = vmatprep.subr.bf16.mxu0 %v1622
    %2416 = vmatpush1.bf16.msra.mxu0 %v1621
    %2417 = vmatprep.subr.bf16.mxu0 %v1628
    %2418 = vmatpush1.bf16.msra.mxu0 %v1627
    %2419 = vmatprep.subr.bf16.mxu0 %v1634
    %2420 = vmatpush1.bf16.msra.mxu0 %v1633
    %2421 = vmatprep.subr.bf16.mxu0 %v1640
    %2422 = vmatpush1.bf16.msra.mxu0 %v1639
    %2423 = vmatprep.subr.bf16.mxu0 %v1646
    %2424 = vmatpush1.bf16.msra.mxu0 %v1645
    %2425 = vmatprep.subr.bf16.mxu0 %v1652
    %2426 = vmatpush1.bf16.msra.mxu0 %v1651
    %2427 = vmatprep.subr.bf16.mxu0 %v1658
    %2428 = vmatpush1.bf16.msra.mxu0 %v1657
    %2429 = vmatprep.subr.bf16.mxu0 %v1664
    %2430 = vmatpush1.bf16.msra.mxu0 %v1663
    %2431 = vmatprep.subr.bf16.mxu0 %v1670
    %2432 = vmatpush1.bf16.msra.mxu0 %v1669
    %2433 = vmatprep.subr.bf16.mxu0 %v1676
    %2434 = vmatpush1.bf16.msra.mxu0 %v1675
    %2435 = vmatprep.mubr.bf16.mxu0 %v392
    %2436 = vmatmul.mubr.bf16.gmra.mrb[0].mxu0 %v391
    %v2437 = vpop.f32.mrb[0].mxu0
    %v2438 = vadd.f32 %v706, %v2437
    %v2439 = vpop.f32.mrb[0].mxu0
    %v2440 = vadd.f32 %v710, %v2439
    %v2441 = vpop.f32.mrb[0].mxu0
    %v2442 = vpop.f32.mrb[0].mxu0
    %2443 = vdwg.mxu0
    %2444 = vmatprep.subr.bf16.mxu0 %v1682
    %2445 = vmatpush1.bf16.msra.mxu0 %v1681
    %2446 = vmatprep.subr.bf16.mxu0 %v1688
    %2447 = vmatpush1.bf16.msra.mxu0 %v1687
    %2448 = vmatprep.subr.bf16.mxu0 %v1694
    %2449 = vmatpush1.bf16.msra.mxu0 %v1693
    %2450 = vmatprep.subr.bf16.mxu0 %v1700
    %2451 = vmatpush1.bf16.msra.mxu0 %v1699
    %2452 = vmatprep.subr.bf16.mxu0 %v1706
    %2453 = vmatpush1.bf16.msra.mxu0 %v1705
    %2454 = vmatprep.subr.bf16.mxu0 %v1712
    %2455 = vmatpush1.bf16.msra.mxu0 %v1711
    %2456 = vmatprep.subr.bf16.mxu0 %v1718
    %2457 = vmatpush1.bf16.msra.mxu0 %v1717
    %2458 = vmatprep.subr.bf16.mxu0 %v1724
    %2459 = vmatpush1.bf16.msra.mxu0 %v1723
    %2460 = vmatprep.subr.bf16.mxu0 %v1730
    %2461 = vmatpush1.bf16.msra.mxu0 %v1729
    %2462 = vmatprep.subr.bf16.mxu0 %v1736
    %2463 = vmatpush1.bf16.msra.mxu0 %v1735
    %2464 = vmatprep.subr.bf16.mxu0 %v1742
    %2465 = vmatpush1.bf16.msra.mxu0 %v1741
    %2466 = vmatprep.subr.bf16.mxu0 %v1748
    %2467 = vmatpush1.bf16.msra.mxu0 %v1747
    %2468 = vmatprep.subr.bf16.mxu0 %v1754
    %2469 = vmatpush1.bf16.msra.mxu0 %v1753
    %2470 = vmatprep.subr.bf16.mxu0 %v1760
    %2471 = vmatpush1.bf16.msra.mxu0 %v1759
    %2472 = vmatprep.subr.bf16.mxu0 %v1766
    %2473 = vmatpush1.bf16.msra.mxu0 %v1765
    %2474 = vmatprep.subr.bf16.mxu0 %v1772
    %2475 = vmatpush1.bf16.msra.mxu0 %v1771
    %2476 = vmatprep.mubr.bf16.mxu0 %v394
    %2477 = vmatmul.mubr.bf16.gmra.mrb[0].mxu0 %v393
    %v2478 = vpop.f32.mrb[0].mxu0
    %v2479 = vadd.f32 %v2438, %v2478
    %v2480 = vpop.f32.mrb[0].mxu0
    %v2481 = vadd.f32 %v2440, %v2480
    %v2482 = vpop.f32.mrb[0].mxu0
    %v2483 = vpop.f32.mrb[0].mxu0
    %2484 = vdwg.mxu0
    %2485 = vmatprep.subr.bf16.mxu0 %v1778
    %2486 = vmatpush1.bf16.msra.mxu0 %v1777
    %2487 = vmatprep.subr.bf16.mxu0 %v1784
    %2488 = vmatpush1.bf16.msra.mxu0 %v1783
    %2489 = vmatprep.subr.bf16.mxu0 %v1790
    %2490 = vmatpush1.bf16.msra.mxu0 %v1789
    %2491 = vmatprep.subr.bf16.mxu0 %v1796
    %2492 = vmatpush1.bf16.msra.mxu0 %v1795
    %2493 = vmatprep.subr.bf16.mxu0 %v1802
    %2494 = vmatpush1.bf16.msra.mxu0 %v1801
    %2495 = vmatprep.subr.bf16.mxu0 %v1808
    %2496 = vmatpush1.bf16.msra.mxu0 %v1807
    %2497 = vmatprep.subr.bf16.mxu0 %v1814
    %2498 = vmatpush1.bf16.msra.mxu0 %v1813
    %2499 = vmatprep.subr.bf16.mxu0 %v1820
    %2500 = vmatpush1.bf16.msra.mxu0 %v1819
    %2501 = vmatprep.subr.bf16.mxu0 %v1826
    %2502 = vmatpush1.bf16.msra.mxu0 %v1825
    %2503 = vmatprep.subr.bf16.mxu0 %v1832
    %2504 = vmatpush1.bf16.msra.mxu0 %v1831
    %2505 = vmatprep.subr.bf16.mxu0 %v1838
    %2506 = vmatpush1.bf16.msra.mxu0 %v1837
    %2507 = vmatprep.subr.bf16.mxu0 %v1844
    %2508 = vmatpush1.bf16.msra.mxu0 %v1843
    %2509 = vmatprep.subr.bf16.mxu0 %v1850
    %2510 = vmatpush1.bf16.msra.mxu0 %v1849
    %2511 = vmatprep.subr.bf16.mxu0 %v1856
    %2512 = vmatpush1.bf16.msra.mxu0 %v1855
    %2513 = vmatprep.subr.bf16.mxu0 %v1862
    %2514 = vmatpush1.bf16.msra.mxu0 %v1861
    %2515 = vmatprep.subr.bf16.mxu0 %v1868
    %2516 = vmatpush1.bf16.msra.mxu0 %v1867
    %2517 = vmatprep.mubr.bf16.mxu0 %v396
    %2518 = vmatmul.mubr.bf16.gmra.mrb[0].mxu0 %v395
    %v2519 = vpop.f32.mrb[0].mxu0
    %v2520 = vadd.f32 %v2479, %v2519
    %v2521 = vpop.f32.mrb[0].mxu0
    %v2522 = vadd.f32 %v2481, %v2521
    %v2523 = vpop.f32.mrb[0].mxu0
    %v2524 = vpop.f32.mrb[0].mxu0
    %2525 = vdwg.mxu0
    %v2526 = vmul.f32 %v2274, %v2274
    %v2527 = vmul.f32 %v2276, %v2276
    %v2528 = vmul.f32 %v2397, %v2397
    %v2529 = vmul.f32 %v2399, %v2399
    %v2530 = vmul.f32 %v2520, %v2520
    %v2531 = vmul.f32 %v2522, %v2522
    %v2532 = vmul.f32 %v2274, %v2526
    %v2533 = vmul.f32 %v2276, %v2527
    %v2534 = vmul.f32 %v2397, %v2528
    %v2535 = vmul.f32 %v2399, %v2529
    %v2536 = vmul.f32 %v2520, %v2530
    %v2537 = vmul.f32 %v2522, %v2531
    %v2538 = vmul.f32 %v2532, 0.044715
    %v2539 = vmul.f32 %v2533, 0.044715
    %v2540 = vmul.f32 %v2534, 0.044715
    %v2541 = vmul.f32 %v2535, 0.044715
    %v2542 = vmul.f32 %v2536, 0.044715
    %v2543 = vmul.f32 %v2537, 0.044715
    %v2544 = vadd.f32 %v2274, %v2538
    %v2545 = vadd.f32 %v2276, %v2539
    %v2546 = vadd.f32 %v2397, %v2540
    %v2547 = vadd.f32 %v2399, %v2541
    %v2548 = vadd.f32 %v2520, %v2542
    %v2549 = vadd.f32 %v2522, %v2543
    %v2550 = vmul.f32 %v2544, 0.7978846
    %v2551 = vmul.f32 %v2545, 0.7978846
    %v2552 = vmul.f32 %v2546, 0.7978846
    %v2553 = vmul.f32 %v2547, 0.7978846
    %v2554 = vmul.f32 %v2548, 0.7978846
    %v2555 = vmul.f32 %v2549, 0.7978846
    %v2556 = vtanh.pop %v2550
    %v2557 = vtanh.pop %v2551
    %v2558 = vtanh.pop %v2552
    %v2559 = vtanh.pop %v2553
    %v2560 = vtanh.pop %v2554
    %v2561 = vtanh.pop %v2555
    %v2562 = vadd.f32 %v2556, 1.0
    %v2563 = vadd.f32 %v2557, 1.0
    %v2564 = vadd.f32 %v2558, 1.0
    %v2565 = vadd.f32 %v2559, 1.0
    %v2566 = vadd.f32 %v2560, 1.0
    %v2567 = vadd.f32 %v2561, 1.0
    %v2568 = vmul.f32 %v2562, 0.5
    %v2569 = vmul.f32 %v2563, 0.5
    %v2570 = vmul.f32 %v2564, 0.5
    %v2571 = vmul.f32 %v2565, 0.5
    %v2572 = vmul.f32 %v2566, 0.5
    %v2573 = vmul.f32 %v2567, 0.5
    %v2574 = vmul.f32 %v2274, %v2568
    %v2575 = vmul.f32 %v2276, %v2569
    %v2576 = vmul.f32 %v2397, %v2570
    %v2577 = vmul.f32 %v2399, %v2571
    %v2578 = vmul.f32 %v2520, %v2572
    %v2579 = vmul.f32 %v2522, %v2573
    %v2580 = vld [vmem:[#allocation12] sm:$0x3f]
    %v2582 = vlaneseq
    %v2583 = vshrl.u32 %v2582, 7
    %v2584 = vsub.s32 0, %v2583
    %v2585 = vrot.slane %v2580, %v2584
    %v2586 = vlaneseq
    %v2587 = vshrl.u32 %v2586, 7
    %v2588 = vsub.s32 1, %v2587
    %v2589 = vrot.slane %v2580, %v2588
    %v2590 = vlaneseq
    %v2591 = vshrl.u32 %v2590, 7
    %v2592 = vsub.s32 2, %v2591
    %v2593 = vrot.slane %v2580, %v2592
    %v2594 = vlaneseq
    %v2595 = vshrl.u32 %v2594, 7
    %v2596 = vsub.s32 3, %v2595
    %v2597 = vrot.slane %v2580, %v2596
    %v2598 = vlaneseq
    %v2599 = vshrl.u32 %v2598, 7
    %v2600 = vsub.s32 4, %v2599
    %v2601 = vrot.slane %v2580, %v2600
    %v2602 = vlaneseq
    %v2603 = vshrl.u32 %v2602, 7
    %v2604 = vsub.s32 5, %v2603
    %v2605 = vrot.slane %v2580, %v2604
    %v2612 = vmul.f32 %v2574, %v2585
    %v2613 = vmul.f32 %v2575, %v2589
    %v2614 = vmul.f32 %v2576, %v2593
    %v2615 = vmul.f32 %v2577, %v2597
    %v2616 = vmul.f32 %v2578, %v2601
    %v2617 = vmul.f32 %v2579, %v2605
    %v2618 = vadd.f32 %v2612, %v2613
    %v2619 = vadd.f32 %v2618, %v2614
    %v2620 = vadd.f32 %v2619, %v2615
    %v2621 = vadd.f32 %v2620, %v2616
    %v2622 = vadd.f32 %v2621, %v2617
    %2623 = vadd.xlane.f32.xlu0 %v2622
    %v2624 = vpop.xlane.xlu0 %2623
    %v2625 = vld [vmem:[#allocation2] sm:$0x1]
    %v2627 = vlaneseq
    %v2628 = vshrl.u32 %v2627, 7
    %v2629 = vsub.s32 0, %v2628
    %v2630 = vrot.slane %v2625, %v2629
    %v2632 = vadd.f32 %v2624, %v2630
    %vm2633 = vcmask 7168
    %2634 = vst.msk [vmem:[#allocation14] sm:$0xff] %vm2633, %v2632
    // Predicated region
    $region54: #{_regressor_forward_impl.1} parent=1 // pred_check
      _
    $region55: #{_regressor_forward_impl.1} parent=1 // pred_check_branch
      %2636 = sbr.rel (0) target = $region57
    $region56: #{_regressor_forward_impl.1} parent=1 // pred_region
      %s2638 = ssub.s32 128, 128
      %2639 = vsyncadd [#allocation5], %s2638
      %s2641 = sshll.u32 [#allocation14], 4
      %s2642 = int_to_ptr.vmem [resolvable:$true] %s2641
      %2644 = dma.vmem_to_hbm [thread:$0]  %s2642, 128, %s7, [#allocation5]
    $region57: #{_regressor_forward_impl.1} parent=1 // pred_fallthru
      _
    // Predicated region
    $region58: #{_regressor_forward_impl.1} parent=1 // pred_check
      _
    $region59: #{_regressor_forward_impl.1} parent=1 // pred_check_branch
      %2646 = sbr.rel (0) target = $region61
    $region60: #{_regressor_forward_impl.1} parent=1 // pred_region
      %2647 = dma.done [#allocation5], 128
    $region61: #{_regressor_forward_impl.1} parent=1 // pred_fallthru
      _
    %2648 = vsyncpa [#allocation4], 1
    %2649 = vsyncpa [#allocation7], 1
    %2650 = vsyncpa [#allocation10], 1
    %2651 = vsyncpa [#allocation13], 1
    %2652 = vsyncpa [#allocation5], 1

</llo_original>
